<compile_context>
chip_gen: v7x
topology: tpu7x:2x2x1
jax: 0.10.0
libtpu: 0.0.40
codegen_flags: <defaults>
</compile_context>

<pallas_src>
import functools
import math

import jax
import jax.numpy as jnp
from jax import lax
from jax.experimental import pallas as pl
from jax.experimental.pallas import tpu as pltpu


# ----------------------------------------------------------------------------
# helpers
# ----------------------------------------------------------------------------
def _round_up(v, m):
    return -(-v // m) * m


def _physical_vmem_bytes():
    """Physical VMEM of the local TPU; conservative 64 MiB (v7x) fallback."""
    try:
        return int(pltpu.get_tpu_info().vmem_capacity_bytes)
    except Exception:  # pragma: no cover - interpret mode / older jax
        return 64 << 20


def _vmem_bytes_estimate(N, D, heads, tq, mxu_bytes, out_bytes, attn_bytes,
                         save_attn):
    """Rough per-step VMEM footprint (blocks + scratch) incl. (8,128) padding."""
    hd = D // heads
    lane, sub = 128, 8
    x_blk = _round_up(N, sub) * _round_up(D, lane) * mxu_bytes            # Buffered(1)
    w_blk = _round_up(D, sub) * _round_up(3 * D, lane) * mxu_bytes        # Buffered(1)
    b_blk = sub * _round_up(3 * D, lane) * 4                              # Buffered(1)
    o_blk = 2 * _round_up(tq, sub) * _round_up(D, lane) * out_bytes       # double-buffered
    a_blk = (2 * heads * _round_up(tq, sub) * _round_up(N, lane) * attn_bytes
             if save_attn else 0)
    scr = 3 * heads * _round_up(N, sub) * _round_up(hd, lane) * mxu_bytes
    return x_blk + w_blk + b_blk + o_blk + a_blk + scr


def _auto_q_tile(N, D, heads, mxu_bytes, out_bytes, attn_bytes, save_attn,
                 phys_vmem):
    """Largest query tile (<=256) whose footprint fits the VMEM budget."""
    if N <= 256:
        return N
    for cand in (256, 128, 64, 32, 16, 8):
        if N % cand:
            continue
        est = _vmem_bytes_estimate(N, D, heads, cand, mxu_bytes, out_bytes,
                                   attn_bytes, save_attn)
        if est * 3 // 2 + (4 << 20) <= phys_vmem:
            return cand
    for cand in (8, 16, 32, 64, 128, 256):   # last resort: smallest divisor
        if N % cand == 0:
            return cand
    return N


def _buffered_spec(shape, index_map, buffer_count):
    """BlockSpec with reduced multi-buffering; falls back if unsupported."""
    try:
        return pl.BlockSpec(shape, index_map,
                            pipeline_mode=pl.Buffered(buffer_count))
    except Exception:  # pragma: no cover - older jax without pipeline_mode
        return pl.BlockSpec(shape, index_map)


# ----------------------------------------------------------------------------
# kernel
# ----------------------------------------------------------------------------
def _attention_kernel(x_ref, wqkv_ref, bqkv_ref, out_ref, *rest,
                      heads, mxu_dtype, save_attn):
    # x_ref:    (1, N, D)       tokens of the current batch (resident across q-tiles)
    # wqkv_ref: (D, 3D)         fused [Wq*scale | Wk | Wv] (single-buffered, one DMA)
    # bqkv_ref: (1, 3D)         fused [bq*scale | bk | bv]
    # out_ref:  (1, tq, D)      output slab, torch (B, N, H*hd) layout
    # attn_ref: (1, H, tq, N)   attention probabilities (only if save_attn)
    # q/k/v_sc: (H, N, hd) VMEM head-major projections cached per batch
    if save_attn:
        attn_ref, q_sc, k_sc, v_sc = rest
    else:
        attn_ref = None
        q_sc, k_sc, v_sc = rest

    _, N, D = x_ref.shape
    hd = D // heads
    tq = out_ref.shape[1]
    qt = pl.program_id(1)

    # Fused QKV projection: computed once per batch (qt == 0), cached head-major
    # so per-head attention slices below are tile-aligned.
    @pl.when(qt == 0)
    def _():
        qkv = jnp.dot(x_ref[0], wqkv_ref[...],
                      preferred_element_type=jnp.float32) + bqkv_ref[...]
        for h in range(heads):                    # once per batch, not per q-tile
            lo = h * hd
            q_sc[h] = qkv[:, lo:lo + hd].astype(q_sc.dtype)        # scale folded into Wq
            k_sc[h] = qkv[:, D + lo:D + lo + hd].astype(k_sc.dtype)
            v_sc[h] = qkv[:, 2 * D + lo:2 * D + lo + hd].astype(v_sc.dtype)

    q0 = pl.multiple_of(qt * tq, tq)
    q_tile = q_sc[:, pl.ds(q0, tq), :]            # (H, tq, hd)
    k_all = k_sc[...]                             # (H, N,  hd)
    v_all = v_sc[...]                             # (H, N,  hd)

    # Scores for all heads at once (batched MXU matmul, contract over hd).
    scores = jnp.einsum("hqd,hkd->hqk", q_tile, k_all,
                        preferred_element_type=jnp.float32)        # (H, tq, N)

    # Numerically-stable softmax in fp32, vectorized across heads.
    m = jnp.max(scores, axis=-1, keepdims=True)
    p = jnp.exp(scores - m)
    denom = jnp.sum(p, axis=-1, keepdims=True)
    inv = pl.reciprocal(denom, approx=True)       # EUP slot
    inv = inv * (2.0 - denom * inv)               # one Newton step -> fp32 accuracy
    attn_all = p * inv                            # (H, tq, N)

    if save_attn:
        attn_ref[0] = attn_all.astype(attn_ref.dtype)   # single stacked store

    # attn @ V for all heads, then ONE lane-dense (tq, D) store in torch layout
    # (head-major column order == torch transpose(1,2).view(B, N, H*hd)).
    out_h = jnp.einsum("hqk,hkd->hqd", attn_all.astype(mxu_dtype), v_all,
                       preferred_element_type=jnp.float32)         # (H, tq, hd)
    out_ref[0] = jnp.concatenate(
        [out_h[h] for h in range(heads)], axis=-1).astype(out_ref.dtype)


# ----------------------------------------------------------------------------
# wrapper
# ----------------------------------------------------------------------------
def attention_forward(x, wq, wk, wv, bq, bk, bv, heads, *,
                      mxu_dtype=jnp.bfloat16, attn_dtype=jnp.bfloat16,
                      return_attn=True, q_tile=None):
    """Pallas multi-head attention (PyTorch Attention.forward, eval mode).

    Args:
      x: (B, N, D) float32
      wq/wk/wv: (D, D) laid out for y = x @ W + b;  bq/bk/bv: (D,)
      mxu_dtype: dtype fed to the MXU matmuls (bf16 default on all generations;
                 softmax math, accumulation and the main output stay fp32).
                 Use jnp.float32 for bit-level parity with PyTorch.
      attn_dtype: dtype of the returned (B, H, N, N) attention probabilities.
      return_attn: if False, the attention-probability writeback (the HBM-store
                 bottleneck at real ViT sizes) is skipped and None is returned.
      q_tile: query tile; None = auto (largest of 256/128/... that fits VMEM).
    Returns:
      out:  (B, N, D) in x.dtype
      attn: (B, heads, N, N) in attn_dtype, or None if return_attn=False
    """
    B, N, D = x.shape
    assert D % heads == 0
    hd = D // heads
    scale = 1.0 / math.sqrt(hd)

    # Fold the softmax scale into the Q projection; fuse the three projections
    # into one (D, 3D) weight so the kernel runs a single wide MXU matmul/batch.
    wqkv = jnp.concatenate([wq * scale, wk, wv], axis=1)            # (D, 3D)
    bqkv = jnp.concatenate([bq * scale, bk, bv], axis=0)[None, :]   # (1, 3D) fp32

    mxu_bytes = jnp.dtype(mxu_dtype).itemsize
    out_bytes = jnp.dtype(x.dtype).itemsize
    attn_bytes = jnp.dtype(attn_dtype).itemsize if return_attn else 0
    phys_vmem = _physical_vmem_bytes()

    if q_tile is None:
        tq = _auto_q_tile(N, D, heads, mxu_bytes, out_bytes, attn_bytes,
                          return_attn, phys_vmem)
    else:
        tq = N if N <= q_tile else q_tile
    # TODO(synk): ragged N (e.g. ViT's N=197) needs padding/masking.
    assert N % tq == 0, "sequence length must be a multiple of the query tile"
    n_qt = N // tq

    # VMEM budget derived from the actual footprint, clamped to physical VMEM.
    vmem_est = _vmem_bytes_estimate(N, D, heads, tq, mxu_bytes, out_bytes,
                                    attn_bytes, return_attn)
    vmem_limit = int(max(32 << 20, min(vmem_est * 3 // 2 + (4 << 20),
                                       phys_vmem)))

    kernel = functools.partial(_attention_kernel, heads=heads,
                               mxu_dtype=mxu_dtype, save_attn=return_attn)

    in_specs = [
        _buffered_spec((1, N, D), lambda b, q: (b, 0, 0), 1),     # x: re-DMA'd once per batch
        _buffered_spec((D, 3 * D), lambda b, q: (0, 0), 1),       # fused weights: one DMA
        _buffered_spec((1, 3 * D), lambda b, q: (0, 0), 1),       # fused bias: one DMA
    ]
    out_spec_main = pl.BlockSpec((1, tq, D), lambda b, q: (b, q, 0))   # lane-dense slab
    scratch = [pltpu.VMEM((heads, N, hd), mxu_dtype)] * 3              # Q, K, V per batch

    if return_attn:
        out_shape = (jax.ShapeDtypeStruct((B, N, D), x.dtype),
                     jax.ShapeDtypeStruct((B, heads, N, N), attn_dtype))
        out_specs = [out_spec_main,
                     pl.BlockSpec((1, heads, tq, N), lambda b, q: (b, 0, q, 0))]
    else:
        out_shape = jax.ShapeDtypeStruct((B, N, D), x.dtype)
        out_specs = out_spec_main

    result = pl.pallas_call(
        kernel,
        out_shape=out_shape,
        grid_spec=pltpu.PrefetchScalarGridSpec(
            num_scalar_prefetch=0,
            grid=(B, n_qt),
            in_specs=in_specs,
            out_specs=out_specs,
            scratch_shapes=scratch,
        ),
        compiler_params=pltpu.CompilerParams(
            # batch axis shards across v7x's two TensorCores; inner axis must
            # stay "arbitrary" (sequential) for the qt==0 K/V caching.
            dimension_semantics=("parallel", "arbitrary"),
            vmem_limit_bytes=vmem_limit,
        ),
    )(x.astype(mxu_dtype), wqkv.astype(mxu_dtype), bqkv)

    if return_attn:
        out, attn = result
        return out, attn
    return result, None


# ----------------------------------------------------------------------------
# reference + test
# ----------------------------------------------------------------------------
def _reference(x, wq, wk, wv, bq, bk, bv, heads):
    B, N, D = x.shape
    hd = D // heads
    q = (x @ wq + bq).reshape(B, N, heads, hd).transpose(0, 2, 1, 3)
    k = (x @ wk + bk).reshape(B, N, heads, hd).transpose(0, 2, 1, 3)
    v = (x @ wv + bv).reshape(B, N, heads, hd).transpose(0, 2, 1, 3)
    attn = jnp.einsum("bhqd,bhkd->bhqk", q, k) / math.sqrt(hd)
    attn = jax.nn.softmax(attn, axis=-1)
    out = jnp.einsum("bhqk,bhkd->bhqd", attn, v)
    out = out.transpose(0, 2, 1, 3).reshape(B, N, D)
    return out, attn


if __name__ == "__main__":
    # Small shapes implied by the module: dim divisible by heads=8.
    B, N, D, heads = 2, 8, 32, 8

    key = jax.random.PRNGKey(0)
    kx, kwq, kwk, kwv, kbq, kbk, kbv = jax.random.split(key, 7)

    x = jax.random.normal(kx, (B, N, D), dtype=jnp.float32)
    wq = 0.05 * jax.random.normal(kwq, (D, D), dtype=jnp.float32)
    wk = 0.05 * jax.random.normal(kwk, (D, D), dtype=jnp.float32)
    wv = 0.05 * jax.random.normal(kwv, (D, D), dtype=jnp.float32)
    bq = 0.01 * jax.random.normal(kbq, (D,), dtype=jnp.float32)
    bk = 0.01 * jax.random.normal(kbk, (D,), dtype=jnp.float32)
    bv = 0.01 * jax.random.normal(kbv, (D,), dtype=jnp.float32)

    out_ref_, attn_ref_ = _reference(x, wq, wk, wv, bq, bk, bv, heads)

    # fp32 path: exact parity with the PyTorch module (eval mode).
    out, attn = attention_forward(x, wq, wk, wv, bq, bk, bv, heads,
                                  mxu_dtype=jnp.float32,
                                  attn_dtype=jnp.float32)
    jax.block_until_ready((out, attn))
    assert out.shape == (B, N, D)
    assert attn.shape == (B, heads, N, N)
    assert jnp.allclose(out, out_ref_, atol=1e-5, rtol=1e-5)
    assert jnp.allclose(attn, attn_ref_, atol=1e-5, rtol=1e-5)

    # Default fast path: bf16 MXU + bf16 attention output (softmax/accum fp32).
    out_bf, attn_bf = attention_forward(x, wq, wk, wv, bq, bk, bv, heads)
    jax.block_until_ready((out_bf, attn_bf))
    assert jnp.allclose(out_bf, out_ref_, atol=3e-2, rtol=3e-2)
    assert jnp.allclose(attn_bf.astype(jnp.float32), attn_ref_,
                        atol=3e-2, rtol=3e-2)

    # Cheapest path: skip the (B, H, N, N) attention writeback entirely.
    out_na, attn_na = attention_forward(x, wq, wk, wv, bq, bk, bv, heads,
                                        return_attn=False)
    jax.block_until_ready(out_na)
    assert attn_na is None
    assert jnp.allclose(out_na, out_ref_, atol=3e-2, rtol=3e-2)

    print("KERNEL_OK")
</pallas_src>

<mosaic_0001>
module attributes {stable_mosaic.version = 11 : i64} {
  func.func @_attention_kernel(%arg0: i32, %arg1: i32, %arg2: memref<1x8x32xf32, #tpu.memory_space<vmem>>, %arg3: memref<32x96xf32, #tpu.memory_space<vmem>>, %arg4: memref<1x96xf32, #tpu.memory_space<vmem>>, %arg5: memref<1x8x32xf32, #tpu.memory_space<vmem>>, %arg6: memref<1x8x8x8xf32, #tpu.memory_space<vmem>>, %arg7: memref<8x8x4xf32, #tpu.memory_space<vmem>>, %arg8: memref<8x8x4xf32, #tpu.memory_space<vmem>>, %arg9: memref<8x8x4xf32, #tpu.memory_space<vmem>>) attributes {dimension_semantics = [#tpu.dimension_semantics<parallel>, #tpu.dimension_semantics<arbitrary>], iteration_bounds = array<i64: 2, 1>, scalar_prefetch = 0 : i64, scratch_operands = 3 : i64, tpu.core_type = #tpu.core_type<tc>, window_params = [{pipeline_mode = #tpu.pipeline_mode<synchronous>, transform_indices = @transform_0, window_bounds = array<i64: 1, 8, 32>}, {pipeline_mode = #tpu.pipeline_mode<synchronous>, transform_indices = @transform_1, window_bounds = array<i64: 32, 96>}, {pipeline_mode = #tpu.pipeline_mode<synchronous>, transform_indices = @transform_2, window_bounds = array<i64: 1, 96>}, {transform_indices = @transform_3, window_bounds = array<i64: 1, 8, 32>}, {transform_indices = @transform_4, window_bounds = array<i64: 1, 8, 8, 8>}]} {
    %c0_i32 = arith.constant 0 : i32
    %0 = arith.cmpi eq, %arg1, %c0_i32 : i32
    %1 = arith.extui %0 : i1 to i32
    %c0_i32_0 = arith.constant 0 : i32
    %2 = arith.cmpi ne, %1, %c0_i32_0 : i32
    scf.if %2 {
      %c0_19 = arith.constant 0 : index
      %c0_20 = arith.constant 0 : index
      %c0_21 = arith.constant 0 : index
      %48 = vector.load %arg2[%c0_19, %c0_20, %c0_21] : memref<1x8x32xf32, #tpu.memory_space<vmem>>, vector<1x8x32xf32>
      %49 = vector.shape_cast %48 : vector<1x8x32xf32> to vector<8x32xf32>
      %c0_22 = arith.constant 0 : index
      %c0_23 = arith.constant 0 : index
      %50 = vector.load %arg3[%c0_22, %c0_23] : memref<32x96xf32, #tpu.memory_space<vmem>>, vector<32x96xf32>
      %cst_24 = arith.constant dense<0.000000e+00> : vector<8x96xf32>
      %51 = tpu.matmul %49, %50, %cst_24 {dimension_numbers = #tpu.dot_dimension_numbers<[1], [0], [0], [1], [0, 0, 1, 1], [], []>} : vector<8x32xf32>, vector<32x96xf32>, vector<8x96xf32> -> vector<8x96xf32>
      %c0_25 = arith.constant 0 : index
      %c0_26 = arith.constant 0 : index
      %52 = vector.load %arg4[%c0_25, %c0_26] : memref<1x96xf32, #tpu.memory_space<vmem>>, vector<1x96xf32>
      %53 = vector.broadcast %52 : vector<1x96xf32> to vector<8x96xf32>
      %54 = arith.addf %51, %53 : vector<8x96xf32>
      %55 = vector.extract_strided_slice %54 {offsets = [0, 0], sizes = [8, 4], strides = [1, 1]} : vector<8x96xf32> to vector<8x4xf32>
      %c0_27 = arith.constant 0 : index
      %c0_28 = arith.constant 0 : index
      %c0_29 = arith.constant 0 : index
      %56 = vector.load %arg7[%c0_27, %c0_28, %c0_29] : memref<8x8x4xf32, #tpu.memory_space<vmem>>, vector<1x8x4xf32>
      %57 = vector.shape_cast %56 : vector<1x8x4xf32> to vector<8x4xf32>
      %58 = vector.shape_cast %55 : vector<8x4xf32> to vector<1x8x4xf32>
      tpu.vector_store %arg7[%c0_27, %c0_28, %c0_29], %58 {strides = array<i32>} : memref<8x8x4xf32, #tpu.memory_space<vmem>>, vector<1x8x4xf32>,
      %59 = vector.extract_strided_slice %54 {offsets = [0, 32], sizes = [8, 4], strides = [1, 1]} : vector<8x96xf32> to vector<8x4xf32>
      %c0_30 = arith.constant 0 : index
      %c0_31 = arith.constant 0 : index
      %c0_32 = arith.constant 0 : index
      %60 = vector.load %arg8[%c0_30, %c0_31, %c0_32] : memref<8x8x4xf32, #tpu.memory_space<vmem>>, vector<1x8x4xf32>
      %61 = vector.shape_cast %60 : vector<1x8x4xf32> to vector<8x4xf32>
      %62 = vector.shape_cast %59 : vector<8x4xf32> to vector<1x8x4xf32>
      tpu.vector_store %arg8[%c0_30, %c0_31, %c0_32], %62 {strides = array<i32>} : memref<8x8x4xf32, #tpu.memory_space<vmem>>, vector<1x8x4xf32>,
      %63 = vector.extract_strided_slice %54 {offsets = [0, 64], sizes = [8, 4], strides = [1, 1]} : vector<8x96xf32> to vector<8x4xf32>
      %c0_33 = arith.constant 0 : index
      %c0_34 = arith.constant 0 : index
      %c0_35 = arith.constant 0 : index
      %64 = vector.load %arg9[%c0_33, %c0_34, %c0_35] : memref<8x8x4xf32, #tpu.memory_space<vmem>>, vector<1x8x4xf32>
      %65 = vector.shape_cast %64 : vector<1x8x4xf32> to vector<8x4xf32>
      %66 = vector.shape_cast %63 : vector<8x4xf32> to vector<1x8x4xf32>
      tpu.vector_store %arg9[%c0_33, %c0_34, %c0_35], %66 {strides = array<i32>} : memref<8x8x4xf32, #tpu.memory_space<vmem>>, vector<1x8x4xf32>,
      %67 = vector.extract_strided_slice %54 {offsets = [0, 4], sizes = [8, 4], strides = [1, 1]} : vector<8x96xf32> to vector<8x4xf32>
      %c1 = arith.constant 1 : index
      %c0_36 = arith.constant 0 : index
      %c0_37 = arith.constant 0 : index
      %68 = vector.load %arg7[%c1, %c0_36, %c0_37] : memref<8x8x4xf32, #tpu.memory_space<vmem>>, vector<1x8x4xf32>
      %69 = vector.shape_cast %68 : vector<1x8x4xf32> to vector<8x4xf32>
      %70 = vector.shape_cast %67 : vector<8x4xf32> to vector<1x8x4xf32>
      tpu.vector_store %arg7[%c1, %c0_36, %c0_37], %70 {strides = array<i32>} : memref<8x8x4xf32, #tpu.memory_space<vmem>>, vector<1x8x4xf32>,
      %71 = vector.extract_strided_slice %54 {offsets = [0, 36], sizes = [8, 4], strides = [1, 1]} : vector<8x96xf32> to vector<8x4xf32>
      %c1_38 = arith.constant 1 : index
      %c0_39 = arith.constant 0 : index
      %c0_40 = arith.constant 0 : index
      %72 = vector.load %arg8[%c1_38, %c0_39, %c0_40] : memref<8x8x4xf32, #tpu.memory_space<vmem>>, vector<1x8x4xf32>
      %73 = vector.shape_cast %72 : vector<1x8x4xf32> to vector<8x4xf32>
      %74 = vector.shape_cast %71 : vector<8x4xf32> to vector<1x8x4xf32>
      tpu.vector_store %arg8[%c1_38, %c0_39, %c0_40], %74 {strides = array<i32>} : memref<8x8x4xf32, #tpu.memory_space<vmem>>, vector<1x8x4xf32>,
      %75 = vector.extract_strided_slice %54 {offsets = [0, 68], sizes = [8, 4], strides = [1, 1]} : vector<8x96xf32> to vector<8x4xf32>
      %c1_41 = arith.constant 1 : index
      %c0_42 = arith.constant 0 : index
      %c0_43 = arith.constant 0 : index
      %76 = vector.load %arg9[%c1_41, %c0_42, %c0_43] : memref<8x8x4xf32, #tpu.memory_space<vmem>>, vector<1x8x4xf32>
      %77 = vector.shape_cast %76 : vector<1x8x4xf32> to vector<8x4xf32>
      %78 = vector.shape_cast %75 : vector<8x4xf32> to vector<1x8x4xf32>
      tpu.vector_store %arg9[%c1_41, %c0_42, %c0_43], %78 {strides = array<i32>} : memref<8x8x4xf32, #tpu.memory_space<vmem>>, vector<1x8x4xf32>,
      %79 = vector.extract_strided_slice %54 {offsets = [0, 8], sizes = [8, 4], strides = [1, 1]} : vector<8x96xf32> to vector<8x4xf32>
      %c2 = arith.constant 2 : index
      %c0_44 = arith.constant 0 : index
      %c0_45 = arith.constant 0 : index
      %80 = vector.load %arg7[%c2, %c0_44, %c0_45] : memref<8x8x4xf32, #tpu.memory_space<vmem>>, vector<1x8x4xf32>
      %81 = vector.shape_cast %80 : vector<1x8x4xf32> to vector<8x4xf32>
      %82 = vector.shape_cast %79 : vector<8x4xf32> to vector<1x8x4xf32>
      tpu.vector_store %arg7[%c2, %c0_44, %c0_45], %82 {strides = array<i32>} : memref<8x8x4xf32, #tpu.memory_space<vmem>>, vector<1x8x4xf32>,
      %83 = vector.extract_strided_slice %54 {offsets = [0, 40], sizes = [8, 4], strides = [1, 1]} : vector<8x96xf32> to vector<8x4xf32>
      %c2_46 = arith.constant 2 : index
      %c0_47 = arith.constant 0 : index
      %c0_48 = arith.constant 0 : index
      %84 = vector.load %arg8[%c2_46, %c0_47, %c0_48] : memref<8x8x4xf32, #tpu.memory_space<vmem>>, vector<1x8x4xf32>
      %85 = vector.shape_cast %84 : vector<1x8x4xf32> to vector<8x4xf32>
      %86 = vector.shape_cast %83 : vector<8x4xf32> to vector<1x8x4xf32>
      tpu.vector_store %arg8[%c2_46, %c0_47, %c0_48], %86 {strides = array<i32>} : memref<8x8x4xf32, #tpu.memory_space<vmem>>, vector<1x8x4xf32>,
      %87 = vector.extract_strided_slice %54 {offsets = [0, 72], sizes = [8, 4], strides = [1, 1]} : vector<8x96xf32> to vector<8x4xf32>
      %c2_49 = arith.constant 2 : index
      %c0_50 = arith.constant 0 : index
      %c0_51 = arith.constant 0 : index
      %88 = vector.load %arg9[%c2_49, %c0_50, %c0_51] : memref<8x8x4xf32, #tpu.memory_space<vmem>>, vector<1x8x4xf32>
      %89 = vector.shape_cast %88 : vector<1x8x4xf32> to vector<8x4xf32>
      %90 = vector.shape_cast %87 : vector<8x4xf32> to vector<1x8x4xf32>
      tpu.vector_store %arg9[%c2_49, %c0_50, %c0_51], %90 {strides = array<i32>} : memref<8x8x4xf32, #tpu.memory_space<vmem>>, vector<1x8x4xf32>,
      %91 = vector.extract_strided_slice %54 {offsets = [0, 12], sizes = [8, 4], strides = [1, 1]} : vector<8x96xf32> to vector<8x4xf32>
      %c3 = arith.constant 3 : index
      %c0_52 = arith.constant 0 : index
      %c0_53 = arith.constant 0 : index
      %92 = vector.load %arg7[%c3, %c0_52, %c0_53] : memref<8x8x4xf32, #tpu.memory_space<vmem>>, vector<1x8x4xf32>
      %93 = vector.shape_cast %92 : vector<1x8x4xf32> to vector<8x4xf32>
      %94 = vector.shape_cast %91 : vector<8x4xf32> to vector<1x8x4xf32>
      tpu.vector_store %arg7[%c3, %c0_52, %c0_53], %94 {strides = array<i32>} : memref<8x8x4xf32, #tpu.memory_space<vmem>>, vector<1x8x4xf32>,
      %95 = vector.extract_strided_slice %54 {offsets = [0, 44], sizes = [8, 4], strides = [1, 1]} : vector<8x96xf32> to vector<8x4xf32>
      %c3_54 = arith.constant 3 : index
      %c0_55 = arith.constant 0 : index
      %c0_56 = arith.constant 0 : index
      %96 = vector.load %arg8[%c3_54, %c0_55, %c0_56] : memref<8x8x4xf32, #tpu.memory_space<vmem>>, vector<1x8x4xf32>
      %97 = vector.shape_cast %96 : vector<1x8x4xf32> to vector<8x4xf32>
      %98 = vector.shape_cast %95 : vector<8x4xf32> to vector<1x8x4xf32>
      tpu.vector_store %arg8[%c3_54, %c0_55, %c0_56], %98 {strides = array<i32>} : memref<8x8x4xf32, #tpu.memory_space<vmem>>, vector<1x8x4xf32>,
      %99 = vector.extract_strided_slice %54 {offsets = [0, 76], sizes = [8, 4], strides = [1, 1]} : vector<8x96xf32> to vector<8x4xf32>
      %c3_57 = arith.constant 3 : index
      %c0_58 = arith.constant 0 : index
      %c0_59 = arith.constant 0 : index
      %100 = vector.load %arg9[%c3_57, %c0_58, %c0_59] : memref<8x8x4xf32, #tpu.memory_space<vmem>>, vector<1x8x4xf32>
      %101 = vector.shape_cast %100 : vector<1x8x4xf32> to vector<8x4xf32>
      %102 = vector.shape_cast %99 : vector<8x4xf32> to vector<1x8x4xf32>
      tpu.vector_store %arg9[%c3_57, %c0_58, %c0_59], %102 {strides = array<i32>} : memref<8x8x4xf32, #tpu.memory_space<vmem>>, vector<1x8x4xf32>,
      %103 = vector.extract_strided_slice %54 {offsets = [0, 16], sizes = [8, 4], strides = [1, 1]} : vector<8x96xf32> to vector<8x4xf32>
      %c4 = arith.constant 4 : index
      %c0_60 = arith.constant 0 : index
      %c0_61 = arith.constant 0 : index
      %104 = vector.load %arg7[%c4, %c0_60, %c0_61] : memref<8x8x4xf32, #tpu.memory_space<vmem>>, vector<1x8x4xf32>
      %105 = vector.shape_cast %104 : vector<1x8x4xf32> to vector<8x4xf32>
      %106 = vector.shape_cast %103 : vector<8x4xf32> to vector<1x8x4xf32>
      tpu.vector_store %arg7[%c4, %c0_60, %c0_61], %106 {strides = array<i32>} : memref<8x8x4xf32, #tpu.memory_space<vmem>>, vector<1x8x4xf32>,
      %107 = vector.extract_strided_slice %54 {offsets = [0, 48], sizes = [8, 4], strides = [1, 1]} : vector<8x96xf32> to vector<8x4xf32>
      %c4_62 = arith.constant 4 : index
      %c0_63 = arith.constant 0 : index
      %c0_64 = arith.constant 0 : index
      %108 = vector.load %arg8[%c4_62, %c0_63, %c0_64] : memref<8x8x4xf32, #tpu.memory_space<vmem>>, vector<1x8x4xf32>
      %109 = vector.shape_cast %108 : vector<1x8x4xf32> to vector<8x4xf32>
      %110 = vector.shape_cast %107 : vector<8x4xf32> to vector<1x8x4xf32>
      tpu.vector_store %arg8[%c4_62, %c0_63, %c0_64], %110 {strides = array<i32>} : memref<8x8x4xf32, #tpu.memory_space<vmem>>, vector<1x8x4xf32>,
      %111 = vector.extract_strided_slice %54 {offsets = [0, 80], sizes = [8, 4], strides = [1, 1]} : vector<8x96xf32> to vector<8x4xf32>
      %c4_65 = arith.constant 4 : index
      %c0_66 = arith.constant 0 : index
      %c0_67 = arith.constant 0 : index
      %112 = vector.load %arg9[%c4_65, %c0_66, %c0_67] : memref<8x8x4xf32, #tpu.memory_space<vmem>>, vector<1x8x4xf32>
      %113 = vector.shape_cast %112 : vector<1x8x4xf32> to vector<8x4xf32>
      %114 = vector.shape_cast %111 : vector<8x4xf32> to vector<1x8x4xf32>
      tpu.vector_store %arg9[%c4_65, %c0_66, %c0_67], %114 {strides = array<i32>} : memref<8x8x4xf32, #tpu.memory_space<vmem>>, vector<1x8x4xf32>,
      %115 = vector.extract_strided_slice %54 {offsets = [0, 20], sizes = [8, 4], strides = [1, 1]} : vector<8x96xf32> to vector<8x4xf32>
      %c5 = arith.constant 5 : index
      %c0_68 = arith.constant 0 : index
      %c0_69 = arith.constant 0 : index
      %116 = vector.load %arg7[%c5, %c0_68, %c0_69] : memref<8x8x4xf32, #tpu.memory_space<vmem>>, vector<1x8x4xf32>
      %117 = vector.shape_cast %116 : vector<1x8x4xf32> to vector<8x4xf32>
      %118 = vector.shape_cast %115 : vector<8x4xf32> to vector<1x8x4xf32>
      tpu.vector_store %arg7[%c5, %c0_68, %c0_69], %118 {strides = array<i32>} : memref<8x8x4xf32, #tpu.memory_space<vmem>>, vector<1x8x4xf32>,
      %119 = vector.extract_strided_slice %54 {offsets = [0, 52], sizes = [8, 4], strides = [1, 1]} : vector<8x96xf32> to vector<8x4xf32>
      %c5_70 = arith.constant 5 : index
      %c0_71 = arith.constant 0 : index
      %c0_72 = arith.constant 0 : index
      %120 = vector.load %arg8[%c5_70, %c0_71, %c0_72] : memref<8x8x4xf32, #tpu.memory_space<vmem>>, vector<1x8x4xf32>
      %121 = vector.shape_cast %120 : vector<1x8x4xf32> to vector<8x4xf32>
      %122 = vector.shape_cast %119 : vector<8x4xf32> to vector<1x8x4xf32>
      tpu.vector_store %arg8[%c5_70, %c0_71, %c0_72], %122 {strides = array<i32>} : memref<8x8x4xf32, #tpu.memory_space<vmem>>, vector<1x8x4xf32>,
      %123 = vector.extract_strided_slice %54 {offsets = [0, 84], sizes = [8, 4], strides = [1, 1]} : vector<8x96xf32> to vector<8x4xf32>
      %c5_73 = arith.constant 5 : index
      %c0_74 = arith.constant 0 : index
      %c0_75 = arith.constant 0 : index
      %124 = vector.load %arg9[%c5_73, %c0_74, %c0_75] : memref<8x8x4xf32, #tpu.memory_space<vmem>>, vector<1x8x4xf32>
      %125 = vector.shape_cast %124 : vector<1x8x4xf32> to vector<8x4xf32>
      %126 = vector.shape_cast %123 : vector<8x4xf32> to vector<1x8x4xf32>
      tpu.vector_store %arg9[%c5_73, %c0_74, %c0_75], %126 {strides = array<i32>} : memref<8x8x4xf32, #tpu.memory_space<vmem>>, vector<1x8x4xf32>,
      %127 = vector.extract_strided_slice %54 {offsets = [0, 24], sizes = [8, 4], strides = [1, 1]} : vector<8x96xf32> to vector<8x4xf32>
      %c6 = arith.constant 6 : index
      %c0_76 = arith.constant 0 : index
      %c0_77 = arith.constant 0 : index
      %128 = vector.load %arg7[%c6, %c0_76, %c0_77] : memref<8x8x4xf32, #tpu.memory_space<vmem>>, vector<1x8x4xf32>
      %129 = vector.shape_cast %128 : vector<1x8x4xf32> to vector<8x4xf32>
      %130 = vector.shape_cast %127 : vector<8x4xf32> to vector<1x8x4xf32>
      tpu.vector_store %arg7[%c6, %c0_76, %c0_77], %130 {strides = array<i32>} : memref<8x8x4xf32, #tpu.memory_space<vmem>>, vector<1x8x4xf32>,
      %131 = vector.extract_strided_slice %54 {offsets = [0, 56], sizes = [8, 4], strides = [1, 1]} : vector<8x96xf32> to vector<8x4xf32>
      %c6_78 = arith.constant 6 : index
      %c0_79 = arith.constant 0 : index
      %c0_80 = arith.constant 0 : index
      %132 = vector.load %arg8[%c6_78, %c0_79, %c0_80] : memref<8x8x4xf32, #tpu.memory_space<vmem>>, vector<1x8x4xf32>
      %133 = vector.shape_cast %132 : vector<1x8x4xf32> to vector<8x4xf32>
      %134 = vector.shape_cast %131 : vector<8x4xf32> to vector<1x8x4xf32>
      tpu.vector_store %arg8[%c6_78, %c0_79, %c0_80], %134 {strides = array<i32>} : memref<8x8x4xf32, #tpu.memory_space<vmem>>, vector<1x8x4xf32>,
      %135 = vector.extract_strided_slice %54 {offsets = [0, 88], sizes = [8, 4], strides = [1, 1]} : vector<8x96xf32> to vector<8x4xf32>
      %c6_81 = arith.constant 6 : index
      %c0_82 = arith.constant 0 : index
      %c0_83 = arith.constant 0 : index
      %136 = vector.load %arg9[%c6_81, %c0_82, %c0_83] : memref<8x8x4xf32, #tpu.memory_space<vmem>>, vector<1x8x4xf32>
      %137 = vector.shape_cast %136 : vector<1x8x4xf32> to vector<8x4xf32>
      %138 = vector.shape_cast %135 : vector<8x4xf32> to vector<1x8x4xf32>
      tpu.vector_store %arg9[%c6_81, %c0_82, %c0_83], %138 {strides = array<i32>} : memref<8x8x4xf32, #tpu.memory_space<vmem>>, vector<1x8x4xf32>,
      %139 = vector.extract_strided_slice %54 {offsets = [0, 28], sizes = [8, 4], strides = [1, 1]} : vector<8x96xf32> to vector<8x4xf32>
      %c7 = arith.constant 7 : index
      %c0_84 = arith.constant 0 : index
      %c0_85 = arith.constant 0 : index
      %140 = vector.load %arg7[%c7, %c0_84, %c0_85] : memref<8x8x4xf32, #tpu.memory_space<vmem>>, vector<1x8x4xf32>
      %141 = vector.shape_cast %140 : vector<1x8x4xf32> to vector<8x4xf32>
      %142 = vector.shape_cast %139 : vector<8x4xf32> to vector<1x8x4xf32>
      tpu.vector_store %arg7[%c7, %c0_84, %c0_85], %142 {strides = array<i32>} : memref<8x8x4xf32, #tpu.memory_space<vmem>>, vector<1x8x4xf32>,
      %143 = vector.extract_strided_slice %54 {offsets = [0, 60], sizes = [8, 4], strides = [1, 1]} : vector<8x96xf32> to vector<8x4xf32>
      %c7_86 = arith.constant 7 : index
      %c0_87 = arith.constant 0 : index
      %c0_88 = arith.constant 0 : index
      %144 = vector.load %arg8[%c7_86, %c0_87, %c0_88] : memref<8x8x4xf32, #tpu.memory_space<vmem>>, vector<1x8x4xf32>
      %145 = vector.shape_cast %144 : vector<1x8x4xf32> to vector<8x4xf32>
      %146 = vector.shape_cast %143 : vector<8x4xf32> to vector<1x8x4xf32>
      tpu.vector_store %arg8[%c7_86, %c0_87, %c0_88], %146 {strides = array<i32>} : memref<8x8x4xf32, #tpu.memory_space<vmem>>, vector<1x8x4xf32>,
      %147 = vector.extract_strided_slice %54 {offsets = [0, 92], sizes = [8, 4], strides = [1, 1]} : vector<8x96xf32> to vector<8x4xf32>
      %c7_89 = arith.constant 7 : index
      %c0_90 = arith.constant 0 : index
      %c0_91 = arith.constant 0 : index
      %148 = vector.load %arg9[%c7_89, %c0_90, %c0_91] : memref<8x8x4xf32, #tpu.memory_space<vmem>>, vector<1x8x4xf32>
      %149 = vector.shape_cast %148 : vector<1x8x4xf32> to vector<8x4xf32>
      %150 = vector.shape_cast %147 : vector<8x4xf32> to vector<1x8x4xf32>
      tpu.vector_store %arg9[%c7_89, %c0_90, %c0_91], %150 {strides = array<i32>} : memref<8x8x4xf32, #tpu.memory_space<vmem>>, vector<1x8x4xf32>,
    } else {
    }
    %c8_i32 = arith.constant 8 : i32
    %3 = arith.muli %arg1, %c8_i32 : i32
    %4 = tpu.assume_multiple %3, 8 : i32
    %c0 = arith.constant 0 : index
    %5 = arith.index_cast %4 : i32 to index
    %c0_1 = arith.constant 0 : index
    %6 = vector.load %arg7[%c0, %5, %c0_1] : memref<8x8x4xf32, #tpu.memory_space<vmem>>, vector<8x8x4xf32>
    %c0_2 = arith.constant 0 : index
    %c0_3 = arith.constant 0 : index
    %c0_4 = arith.constant 0 : index
    %7 = vector.load %arg8[%c0_2, %c0_3, %c0_4] : memref<8x8x4xf32, #tpu.memory_space<vmem>>, vector<8x8x4xf32>
    %c0_5 = arith.constant 0 : index
    %c0_6 = arith.constant 0 : index
    %c0_7 = arith.constant 0 : index
    %8 = vector.load %arg9[%c0_5, %c0_6, %c0_7] : memref<8x8x4xf32, #tpu.memory_space<vmem>>, vector<8x8x4xf32>
    "tpu.trace_start"() <{level = 10 : i32, message = "hqd,hkd->hqk"}> : () -> ()
    %cst = arith.constant dense<0.000000e+00> : vector<8x8x8xf32>
    %9 = tpu.matmul %6, %7, %cst {dimension_numbers = #tpu.dot_dimension_numbers<[2], [2], [1], [1], [0, 0, 0, 1, 1, 1], [0], [0]>} : vector<8x8x4xf32>, vector<8x8x4xf32>, vector<8x8x8xf32> -> vector<8x8x8xf32>
    "tpu.trace_stop"() : () -> ()
    %cst_8 = arith.constant dense<0xFF800000> : vector<8x8xf32>
    %10 = vector.multi_reduction <maximumf>, %9, %cst_8 [2] : vector<8x8x8xf32> to vector<8x8xf32>
    %11 = vector.shape_cast %10 : vector<8x8xf32> to vector<8x8x1xf32>
    %12 = vector.broadcast %11 : vector<8x8x1xf32> to vector<8x8x8xf32>
    %13 = arith.subf %9, %12 : vector<8x8x8xf32>
    %14 = math.exp %13 : vector<8x8x8xf32>
    %cst_9 = arith.constant dense<0.000000e+00> : vector<8x8xf32>
    %15 = vector.multi_reduction <add>, %14, %cst_9 [2] : vector<8x8x8xf32> to vector<8x8xf32>
    %16 = vector.shape_cast %15 : vector<8x8xf32> to vector<8x8x1xf32>
    %17 = tpu.reciprocal %16 {approx = true} : vector<8x8x1xf32> -> vector<8x8x1xf32>
    %18 = arith.mulf %16, %17 : vector<8x8x1xf32>
    %cst_10 = arith.constant 2.000000e+00 : f32
    %19 = vector.broadcast %cst_10 : f32 to vector<8x8x1xf32>
    %20 = arith.subf %19, %18 : vector<8x8x1xf32>
    %21 = arith.mulf %17, %20 : vector<8x8x1xf32>
    %22 = vector.broadcast %21 : vector<8x8x1xf32> to vector<8x8x8xf32>
    %23 = arith.mulf %14, %22 : vector<8x8x8xf32>
    %c0_11 = arith.constant 0 : index
    %c0_12 = arith.constant 0 : index
    %c0_13 = arith.constant 0 : index
    %c0_14 = arith.constant 0 : index
    %24 = vector.load %arg6[%c0_11, %c0_12, %c0_13, %c0_14] : memref<1x8x8x8xf32, #tpu.memory_space<vmem>>, vector<1x8x8x8xf32>
    %25 = vector.shape_cast %24 : vector<1x8x8x8xf32> to vector<8x8x8xf32>
    %26 = vector.shape_cast %23 : vector<8x8x8xf32> to vector<1x8x8x8xf32>
    tpu.vector_store %arg6[%c0_11, %c0_12, %c0_13, %c0_14], %26 {strides = array<i32>} : memref<1x8x8x8xf32, #tpu.memory_space<vmem>>, vector<1x8x8x8xf32>,
    "tpu.trace_start"() <{level = 10 : i32, message = "hqk,hkd->hqd"}> : () -> ()
    %cst_15 = arith.constant dense<0.000000e+00> : vector<8x8x4xf32>
    %27 = tpu.matmul %23, %8, %cst_15 {dimension_numbers = #tpu.dot_dimension_numbers<[2], [1], [1], [2], [0, 0, 0, 1, 1, 2], [0], [0]>} : vector<8x8x8xf32>, vector<8x8x4xf32>, vector<8x8x4xf32> -> vector<8x8x4xf32>
    "tpu.trace_stop"() : () -> ()
    %28 = vector.extract_strided_slice %27 {offsets = [0, 0, 0], sizes = [1, 8, 4], strides = [1, 1, 1]} : vector<8x8x4xf32> to vector<1x8x4xf32>
    %29 = vector.shape_cast %28 : vector<1x8x4xf32> to vector<8x4xf32>
    %30 = vector.extract_strided_slice %27 {offsets = [1, 0, 0], sizes = [1, 8, 4], strides = [1, 1, 1]} : vector<8x8x4xf32> to vector<1x8x4xf32>
    %31 = vector.shape_cast %30 : vector<1x8x4xf32> to vector<8x4xf32>
    %32 = vector.extract_strided_slice %27 {offsets = [2, 0, 0], sizes = [1, 8, 4], strides = [1, 1, 1]} : vector<8x8x4xf32> to vector<1x8x4xf32>
    %33 = vector.shape_cast %32 : vector<1x8x4xf32> to vector<8x4xf32>
    %34 = vector.extract_strided_slice %27 {offsets = [3, 0, 0], sizes = [1, 8, 4], strides = [1, 1, 1]} : vector<8x8x4xf32> to vector<1x8x4xf32>
    %35 = vector.shape_cast %34 : vector<1x8x4xf32> to vector<8x4xf32>
    %36 = vector.extract_strided_slice %27 {offsets = [4, 0, 0], sizes = [1, 8, 4], strides = [1, 1, 1]} : vector<8x8x4xf32> to vector<1x8x4xf32>
    %37 = vector.shape_cast %36 : vector<1x8x4xf32> to vector<8x4xf32>
    %38 = vector.extract_strided_slice %27 {offsets = [5, 0, 0], sizes = [1, 8, 4], strides = [1, 1, 1]} : vector<8x8x4xf32> to vector<1x8x4xf32>
    %39 = vector.shape_cast %38 : vector<1x8x4xf32> to vector<8x4xf32>
    %40 = vector.extract_strided_slice %27 {offsets = [6, 0, 0], sizes = [1, 8, 4], strides = [1, 1, 1]} : vector<8x8x4xf32> to vector<1x8x4xf32>
    %41 = vector.shape_cast %40 : vector<1x8x4xf32> to vector<8x4xf32>
    %42 = vector.extract_strided_slice %27 {offsets = [7, 0, 0], sizes = [1, 8, 4], strides = [1, 1, 1]} : vector<8x8x4xf32> to vector<1x8x4xf32>
    %43 = vector.shape_cast %42 : vector<1x8x4xf32> to vector<8x4xf32>
    %44 = tpu.concatenate %29, %31, %33, %35, %37, %39, %41, %43 in 1 : vector<8x4xf32>, vector<8x4xf32>, vector<8x4xf32>, vector<8x4xf32>, vector<8x4xf32>, vector<8x4xf32>, vector<8x4xf32>, vector<8x4xf32> -> vector<8x32xf32>
    %c0_16 = arith.constant 0 : index
    %c0_17 = arith.constant 0 : index
    %c0_18 = arith.constant 0 : index
    %45 = vector.load %arg5[%c0_16, %c0_17, %c0_18] : memref<1x8x32xf32, #tpu.memory_space<vmem>>, vector<1x8x32xf32>
    %46 = vector.shape_cast %45 : vector<1x8x32xf32> to vector<8x32xf32>
    %47 = vector.shape_cast %44 : vector<8x32xf32> to vector<1x8x32xf32>
    tpu.vector_store %arg5[%c0_16, %c0_17, %c0_18], %47 {strides = array<i32>} : memref<1x8x32xf32, #tpu.memory_space<vmem>>, vector<1x8x32xf32>,
    return
  }
  func.func @transform_0(%arg0: i32, %arg1: i32) -> (i32, i32, i32) {
    %c0_i32 = arith.constant 0 : i32
    %c0_i32_0 = arith.constant 0 : i32
    %c0_i32_1 = arith.constant 0 : i32
    return %arg0, %c0_i32, %c0_i32_0 : i32, i32, i32
  }
  func.func @transform_1(%arg0: i32, %arg1: i32) -> (i32, i32) {
    %c0_i32 = arith.constant 0 : i32
    %c0_i32_0 = arith.constant 0 : i32
    %c0_i32_1 = arith.constant 0 : i32
    return %c0_i32, %c0_i32_0 : i32, i32
  }
  func.func @transform_2(%arg0: i32, %arg1: i32) -> (i32, i32) {
    %c0_i32 = arith.constant 0 : i32
    %c0_i32_0 = arith.constant 0 : i32
    %c0_i32_1 = arith.constant 0 : i32
    return %c0_i32, %c0_i32_0 : i32, i32
  }
  func.func @transform_3(%arg0: i32, %arg1: i32) -> (i32, i32, i32) {
    %c0_i32 = arith.constant 0 : i32
    %c0_i32_0 = arith.constant 0 : i32
    return %arg0, %arg1, %c0_i32 : i32, i32, i32
  }
  func.func @transform_4(%arg0: i32, %arg1: i32) -> (i32, i32, i32, i32) {
    %c0_i32 = arith.constant 0 : i32
    %c0_i32_0 = arith.constant 0 : i32
    %c0_i32_1 = arith.constant 0 : i32
    return %arg0, %c0_i32, %arg1, %c0_i32_0 : i32, i32, i32, i32
  }
}

</mosaic_0001>

<llo_original>
// kernel: tpu_custom_call.1
$region0: #{tpu_custom_call.1}
  #allocation0 [shape = 'u32[]', space=smem, size = 0x4, offset = 0x4, fixed_abs, tag = 'smem constant byte address 0x4 - core index']
  #allocation1 [shape = 'u32[144,128]{1,0:T(1,128)}', space=vmem, size = 0x12000, scoped, tag = 'internal scratch']
  #allocation2 [shape = 'f32[8,8,4]{2,1,0:T(8,128)}', space=vmem, size = 0x8000, scoped, tag = 'scratch operand']
  #allocation3 [shape = 'f32[8,8,4]{2,1,0:T(8,128)}', space=vmem, size = 0x8000, scoped, tag = 'scratch operand']
  #allocation4 [shape = 'f32[8,8,4]{2,1,0:T(8,128)}', space=vmem, size = 0x8000, scoped, tag = 'scratch operand']
  %s0 = inlined_call_operand.hbm [shape: f32[2,8,32], index: 0, kind: input, shape index: {}]
  %s1 = inlined_call_operand.hbm [shape: f32[32,96], index: 1, kind: input, shape index: {}]
  %s2 = inlined_call_operand.vmem [shape: f32[1,96], index: 2, kind: input, shape index: {}]
  %s3 = inlined_call_operand.hbm [shape: f32[2,8,32], index: 3, kind: output, shape index: {0}]
  %s4 = inlined_call_operand.hbm [shape: f32[2,8,8,8], index: 4, kind: output, shape index: {1}]
  %5 = xla_tuple %s3, %s4
  %s6 = sld [smem:[#allocation0]]
  $region65: #{tpu_custom_call.1} parent=0
    _
  %s8 = ssub.s32 1, %s6
  %s9 = scalar_select 0, %s8, %s6
  $region1: #{tpu_custom_call.1} parent=0
    #allocation5 [shape = 'u8[4096]{0}', space=vmem, size = 0x1000, scoped, tag = 'input window, operand 0, single buffered']
    #allocation6 [shape = 's32[2]{0}', space=sflag, size = 0x8, scoped, tag = 'scoped memory for tpu_custom_call.1']
    #allocation7 [shape = 's32[2]{0}', space=sflag, size = 0x8, scoped, tag = 'scoped memory for tpu_custom_call.1']
    #allocation8 [shape = 'u8[16384]{0}', space=vmem, size = 0x4000, scoped, tag = 'input window, operand 1, single buffered']
    #allocation9 [shape = 's32[1]{0}', space=sflag, size = 0x4, scoped, tag = 'scoped memory for tpu_custom_call.1']
    #allocation10 [shape = 'u8[8192]{0}', space=vmem, size = 0x2000, scoped, tag = 'output window, operand 0']
    #allocation11 [shape = 'u8[65536]{0}', space=vmem, size = 0x10000, scoped, tag = 'output window, operand 1']
    #allocation12 [shape = 's32[2]{0}', space=sflag, size = 0x8, scoped, tag = 'scoped memory for tpu_custom_call.1']
    %10 = vsyncpa [#allocation6], 0
    %11 = vsyncpa [#allocation9], 0
    %12 = vsyncpa [#allocation7], 0
    %s13 = scalar_lea.sflag [#allocation7], 1
    %14 = vsyncpa %s13, 0
    %15 = vsyncpa [#allocation12], 0
    %s16 = scalar_lea.sflag [#allocation12], 1
    %17 = vsyncpa %s16, 0
    loop: start=0, step=1, limit=4
    $region2: #{tpu_custom_call.1} parent=1 // loop_pre_header
      _
    $region3: #{tpu_custom_call.1} parent=1 // loop_header
      %s19 = sphi 0, %s23
      %p20 = scmp.ge.s32.totalorder %s19, 4
      %s26 = sphi 0, %s38
      %s27 = sphi 0, %s34
      %s28 = sphi 0, %s26
      %s29 = sphi 0, %s27
      %s30 = sphi 0, %s28
      %s31 = sphi 0, %s29
      %s41 = sphi 0, %s43
      %s44 = sphi 0, %s41
      %s45 = sphi 0, %s44
      %s61 = sphi 0, %s45
      %s65 = sphi 0, %s65
      %s67 = sphi 0, %s65
      %s68 = sphi 0, %s67
      %s82 = sphi 0, %s68
      %s86 = sphi 0, %s86
      %s88 = sphi 0, %s86
      %s89 = sphi 0, %s88
      %s103 = sphi 0, %s89
      %s111 = sphi 0, %s113
      %s114 = sphi 0, %s111
      %s115 = sphi 0, %s114
      %s131 = sphi 0, %s115
      %s139 = sphi 0, %s141
      %s142 = sphi 0, %s139
      %s143 = sphi 0, %s142
      %s159 = sphi 0, %s143
    $region4: #{tpu_custom_call.1} parent=1 // loop_header_branch
      %22 = sbr.rel (%p20) target = $region8
    $region5: #{tpu_custom_call.1} parent=1 // loop_body
      %s24 = ssub.s32 %s19, 1
      %s25 = ssub.s32 %s19, 2
      %s32 = sadd.s32 1, %s27
      %p33 = scmp.ge.s32.totalorder %s32, 1
      %s34 = scalar_select %p33, 0, %s32
      %s35 = sadd.s32 1, %s26
      %s36 = scalar_select %p33, %s35, %s26
      %p37 = scmp.ge.s32.totalorder %s36, 2
      %s38 = scalar_select %p37, 0, %s36
      %s39 = ssub.s32 %s26, %s38
      %p40 = scmp.eq.s32.totalorder %s39, 0
      %s42 = sadd.s32 %s41, 1
      %s43 = scalar_select %p40, %s41, %s42
      %p46 = pneg %p40
      %p47 = scmp.eq.s32.totalorder %s19, 1
      %p48 = por %p46, %p47
      %p49 = scmp.ne.s32.totalorder %s41, %s44
      %p50 = scmp.eq.s32.totalorder %s19, 0
      %p51 = por %p49, %p50
      %p52 = scmp.ne.s32.totalorder %s41, %s44
      %p53 = scmp.eq.s32.totalorder %s24, 1
      %p54 = por %p52, %p53
      %p55 = scmp.ne.s32.totalorder %s44, %s45
      %p56 = scmp.eq.s32.totalorder %s24, 0
      %p57 = por %p55, %p56
      %p58 = scmp.ne.s32.totalorder %s44, %s45
      %p59 = scmp.eq.s32.totalorder %s25, 1
      %p60 = por %p58, %p59
      %p62 = scmp.ne.s32.totalorder %s45, %s61
      %p63 = scmp.eq.s32.totalorder %s25, 0
      %p64 = por %p62, %p63
      %s66 = sadd.s32 %s65, 1
      %p69 = scmp.eq.s32.totalorder %s19, 1
      %p70 = scmp.ne.s32.totalorder %s65, %s67
      %p71 = scmp.eq.s32.totalorder %s19, 0
      %p72 = por %p70, %p71
      %p73 = scmp.ne.s32.totalorder %s65, %s67
      %p74 = scmp.eq.s32.totalorder %s24, 1
      %p75 = por %p73, %p74
      %p76 = scmp.ne.s32.totalorder %s67, %s68
      %p77 = scmp.eq.s32.totalorder %s24, 0
      %p78 = por %p76, %p77
      %p79 = scmp.ne.s32.totalorder %s67, %s68
      %p80 = scmp.eq.s32.totalorder %s25, 1
      %p81 = por %p79, %p80
      %p83 = scmp.ne.s32.totalorder %s68, %s82
      %p84 = scmp.eq.s32.totalorder %s25, 0
      %p85 = por %p83, %p84
      %s87 = sadd.s32 %s86, 1
      %p90 = scmp.eq.s32.totalorder %s19, 1
      %p91 = scmp.ne.s32.totalorder %s86, %s88
      %p92 = scmp.eq.s32.totalorder %s19, 0
      %p93 = por %p91, %p92
      %p94 = scmp.ne.s32.totalorder %s86, %s88
      %p95 = scmp.eq.s32.totalorder %s24, 1
      %p96 = por %p94, %p95
      %p97 = scmp.ne.s32.totalorder %s88, %s89
      %p98 = scmp.eq.s32.totalorder %s24, 0
      %p99 = por %p97, %p98
      %p100 = scmp.ne.s32.totalorder %s88, %s89
      %p101 = scmp.eq.s32.totalorder %s25, 1
      %p102 = por %p100, %p101
      %p104 = scmp.ne.s32.totalorder %s89, %s103
      %p105 = scmp.eq.s32.totalorder %s25, 0
      %p106 = por %p104, %p105
      %s107 = ssub.s32 %s26, %s38
      %s108 = ssub.s32 %s27, %s34
      %s109 = sor.u32 %s107, %s108
      %p110 = scmp.eq.s32.totalorder %s109, 0
      %s112 = sadd.s32 %s111, 1
      %s113 = scalar_select %p110, %s111, %s112
      %p116 = pneg %p110
      %p117 = scmp.eq.s32.totalorder %s19, 1
      %p118 = por %p116, %p117
      %p119 = scmp.ne.s32.totalorder %s111, %s114
      %p120 = scmp.eq.s32.totalorder %s19, 0
      %p121 = por %p119, %p120
      %p122 = scmp.ne.s32.totalorder %s111, %s114
      %p123 = scmp.eq.s32.totalorder %s24, 1
      %p124 = por %p122, %p123
      %p125 = scmp.ne.s32.totalorder %s114, %s115
      %p126 = scmp.eq.s32.totalorder %s24, 0
      %p127 = por %p125, %p126
      %p128 = scmp.ne.s32.totalorder %s114, %s115
      %p129 = scmp.eq.s32.totalorder %s25, 1
      %p130 = por %p128, %p129
      %p132 = scmp.ne.s32.totalorder %s115, %s131
      %p133 = scmp.eq.s32.totalorder %s25, 0
      %p134 = por %p132, %p133
      %s135 = ssub.s32 %s26, %s38
      %s136 = ssub.s32 %s27, %s34
      %s137 = sor.u32 %s135, %s136
      %p138 = scmp.eq.s32.totalorder %s137, 0
      %s140 = sadd.s32 %s139, 1
      %s141 = scalar_select %p138, %s139, %s140
      %p144 = pneg %p138
      %p145 = scmp.eq.s32.totalorder %s19, 1
      %p146 = por %p144, %p145
      %p147 = scmp.ne.s32.totalorder %s139, %s142
      %p148 = scmp.eq.s32.totalorder %s19, 0
      %p149 = por %p147, %p148
      %p150 = scmp.ne.s32.totalorder %s139, %s142
      %p151 = scmp.eq.s32.totalorder %s24, 1
      %p152 = por %p150, %p151
      %p153 = scmp.ne.s32.totalorder %s142, %s143
      %p154 = scmp.eq.s32.totalorder %s24, 0
      %p155 = por %p153, %p154
      %p156 = scmp.ne.s32.totalorder %s142, %s143
      %p157 = scmp.eq.s32.totalorder %s25, 1
      %p158 = por %p156, %p157
      %p160 = scmp.ne.s32.totalorder %s143, %s159
      %p161 = scmp.eq.s32.totalorder %s25, 0
      %p162 = por %p160, %p161
      %p163 = scmp.le.s32.totalorder 1, %s19
      %p164 = scmp.lt.s32.totalorder %s19, 3
      %p165 = pnand %p163, %p164
      %p166 = pneg %p165
      // Predicated region
      $region9: #{tpu_custom_call.1} parent=5 // pred_check
        _
      $region10: #{tpu_custom_call.1} parent=5 // pred_check_branch
        %168 = sbr.rel (%p165) target = $region12
      $region11: #{tpu_custom_call.1} parent=5 // pred_region
        %s169 = ssub.s32 %s19, 1
        // Predicated region
        $region13: #{tpu_custom_call.1} parent=11 // pred_check
          %p170 = pneg %p57
        $region14: #{tpu_custom_call.1} parent=11 // pred_check_branch
          %172 = sbr.rel (%p170) target = $region16
        $region15: #{tpu_custom_call.1} parent=11 // pred_region
          %s174 = ssub.s32 128, 128
          %175 = vsyncadd [#allocation6], %s174
          %s176 = smul.addr %s28, 128
          %s177 = scalar_lea.hbm %s0, %s176
          %s179 = sshll.u32 [#allocation5], 4
          %s180 = int_to_ptr.vmem [resolvable:$true] %s179
          %182 = dma.hbm_to_vmem [thread:$0]  %s177, 128, %s180, [#allocation6]
        $region16: #{tpu_custom_call.1} parent=11 // pred_fallthru
          _
        // Predicated region
        $region17: #{tpu_custom_call.1} parent=11 // pred_check
          %p183 = pneg %p78
        $region18: #{tpu_custom_call.1} parent=11 // pred_check_branch
          %185 = sbr.rel (%p183) target = $region20
        $region19: #{tpu_custom_call.1} parent=11 // pred_region
          %s187 = ssub.s32 512, 512
          %188 = vsyncadd [#allocation9], %s187
          %s189 = sshll.u32 [#allocation8], 4
          %s190 = int_to_ptr.vmem [resolvable:$true] %s189
          %195 = dma.hbm_to_vmem [thread:$0]  %s1, 512, %s190, [#allocation9], 128, 128, 8
        $region20: #{tpu_custom_call.1} parent=11 // pred_fallthru
          _
        // Predicated region
        $region21: #{tpu_custom_call.1} parent=11 // pred_check
          %p196 = pneg %p99
        $region22: #{tpu_custom_call.1} parent=11 // pred_check_branch
          %198 = sbr.rel (%p196) target = $region24
        $region23: #{tpu_custom_call.1} parent=11 // pred_region
          _
        $region24: #{tpu_custom_call.1} parent=11 // pred_fallthru
          _
      $region12: #{tpu_custom_call.1} parent=5 // pred_fallthru
        _
      %p199 = scmp.lt.s32.totalorder %s19, 2
      // Predicated region
      $region25: #{tpu_custom_call.1} parent=5 // pred_check
        %p200 = pneg %p199
      $region26: #{tpu_custom_call.1} parent=5 // pred_check_branch
        %202 = sbr.rel (%p200) target = $region28
      $region27: #{tpu_custom_call.1} parent=5 // pred_region
        _
      $region28: #{tpu_custom_call.1} parent=5 // pred_fallthru
        _
      %p203 = scmp.le.s32.totalorder 1, %s19
      %p204 = scmp.lt.s32.totalorder %s19, 3
      %p205 = pnand %p203, %p204
      %p206 = pneg %p205
      // Predicated region
      $region29: #{tpu_custom_call.1} parent=5 // pred_check
        _
      $region30: #{tpu_custom_call.1} parent=5 // pred_check_branch
        %208 = sbr.rel (%p205) target = $region32
      $region31: #{tpu_custom_call.1} parent=5 // pred_region
        %s209 = ssub.s32 %s19, 1
        // Predicated region
        $region33: #{tpu_custom_call.1} parent=31 // pred_check
          %p210 = pneg %p57
        $region34: #{tpu_custom_call.1} parent=31 // pred_check_branch
          %212 = sbr.rel (%p210) target = $region36
        $region35: #{tpu_custom_call.1} parent=31 // pred_region
          %213 = dma.done [#allocation6], 128
        $region36: #{tpu_custom_call.1} parent=31 // pred_fallthru
          _
        // Predicated region
        $region37: #{tpu_custom_call.1} parent=31 // pred_check
          %p214 = pneg %p78
        $region38: #{tpu_custom_call.1} parent=31 // pred_check_branch
          %216 = sbr.rel (%p214) target = $region40
        $region39: #{tpu_custom_call.1} parent=31 // pred_region
          %217 = dma.done [#allocation9], 512
        $region40: #{tpu_custom_call.1} parent=31 // pred_fallthru
          _
        %p218 = pneg %p57
        %p219 = pneg %p54
        %p220 = pneg %p78
        %p221 = pneg %p75
        %p222 = pneg %p99
        %p223 = pneg %p96
        %p224 = pneg %p127
        %p225 = pneg %p124
        %s226 = sand.u32 %s114, 1
        %s227 = scalar_lea.sflag [#allocation7], %s226
        %s228 = sand.u32 %s114, 1
        %s229 = smul.addr %s228, 8
        %s230 = scalar_lea.vmem [#allocation10], %s229
        %p231 = pneg %p155
        %p232 = pneg %p152
        %s233 = sand.u32 %s142, 1
        %s234 = scalar_lea.sflag [#allocation12], %s233
        %s235 = sand.u32 %s142, 1
        %s236 = smul.addr %s235, 64
        %s237 = scalar_lea.vmem [#allocation11], %s236
        %p238 = scmp.eq.s32.totalorder %s29, 0
        // Predicated region
        $region41: #{tpu_custom_call.1} parent=31 // pred_check
          %p239 = pneg %p238
        $region42: #{tpu_custom_call.1} parent=31 // pred_check_branch
          %241 = sbr.rel (%p239) target = $region44
        $region43: #{tpu_custom_call.1} parent=31 // pred_region
          %v242 = vld [vmem:[#allocation5] sm:$0xff]
          %v243 = vld [vmem:[#allocation8] sm:$0xff]
          %v244 = vld [vmem:[#allocation8 + $0x8] sm:$0xff]
          %v245 = vld [vmem:[#allocation8 + $0x10] sm:$0xff]
          %v246 = vld [vmem:[#allocation8 + $0x18] sm:$0xff]
          %v247 = vld [vmem:[%s2] sm:$0x1]
          %v249 = vlaneseq
          %v250 = vshrl.u32 %v249, 7
          %v251 = vsub.s32 0, %v250
          %v252 = vrot.slane %v247, %v251
          %vm254 = vcmask 261120
          %v256 = vsel %vm254, %v242, 0
          %258 = vmatprep.subr.mxu0 0.0
          %259 = vmatpush1.msra.mxu0 %v243
          %260 = vmatprep.subr.mxu0 0.0
          %261 = vmatpush1.msra.mxu0 %v244
          %262 = vmatprep.subr.mxu0 0.0
          %263 = vmatpush1.msra.mxu0 %v245
          %264 = vmatprep.subr.mxu0 0.0
          %265 = vmatpush1.msra.mxu0 %v246
          %266 = vmatprep.subr.mxu0 0.0
          %267 = vmatpush1.msra.mxu0 0.0
          %268 = vmatprep.subr.mxu0 0.0
          %269 = vmatpush1.msra.mxu0 0.0
          %270 = vmatprep.subr.mxu0 0.0
          %271 = vmatpush1.msra.mxu0 0.0
          %272 = vmatprep.subr.mxu0 0.0
          %273 = vmatpush1.msra.mxu0 0.0
          %274 = vmatprep.subr.mxu0 0.0
          %275 = vmatpush1.msra.mxu0 0.0
          %276 = vmatprep.subr.mxu0 0.0
          %277 = vmatpush1.msra.mxu0 0.0
          %278 = vmatprep.subr.mxu0 0.0
          %279 = vmatpush1.msra.mxu0 0.0
          %280 = vmatprep.subr.mxu0 0.0
          %281 = vmatpush1.msra.mxu0 0.0
          %282 = vmatprep.subr.mxu0 0.0
          %283 = vmatpush1.msra.mxu0 0.0
          %284 = vmatprep.subr.mxu0 0.0
          %285 = vmatpush1.msra.mxu0 0.0
          %286 = vmatprep.subr.mxu0 0.0
          %287 = vmatpush1.msra.mxu0 0.0
          %288 = vmatprep.subr.mxu0 0.0
          %289 = vmatpush1.msra.mxu0 0.0
          %290 = vmatprep.subr.mxu0 0.0
          %291 = vmatpush1.msra.mxu0 0.0
          %292 = vmatprep.subr.mxu0 0.0
          %293 = vmatpush1.msra.mxu0 0.0
          %294 = vmatprep.subr.mxu0 0.0
          %295 = vmatpush1.msra.mxu0 0.0
          %296 = vmatprep.subr.mxu0 0.0
          %297 = vmatpush1.msra.mxu0 0.0
          %298 = vmatprep.subr.mxu0 0.0
          %299 = vmatpush1.msra.mxu0 0.0
          %300 = vmatprep.subr.mxu0 0.0
          %301 = vmatpush1.msra.mxu0 0.0
          %302 = vmatprep.subr.mxu0 0.0
          %303 = vmatpush1.msra.mxu0 0.0
          %304 = vmatprep.subr.mxu0 0.0
          %305 = vmatpush1.msra.mxu0 0.0
          %306 = vmatprep.subr.mxu0 0.0
          %307 = vmatpush1.msra.mxu0 0.0
          %308 = vmatprep.subr.mxu0 0.0
          %309 = vmatpush1.msra.mxu0 0.0
          %310 = vmatprep.subr.mxu0 0.0
          %311 = vmatpush1.msra.mxu0 0.0
          %312 = vmatprep.subr.mxu0 0.0
          %313 = vmatpush1.msra.mxu0 0.0
          %314 = vmatprep.subr.mxu0 0.0
          %315 = vmatpush1.msra.mxu0 0.0
          %316 = vmatprep.subr.mxu0 0.0
          %317 = vmatpush1.msra.mxu0 0.0
          %318 = vmatprep.subr.mxu0 0.0
          %319 = vmatpush1.msra.mxu0 0.0
          %320 = vmatprep.subr.mxu0 0.0
          %321 = vmatpush1.msra.mxu0 0.0
          %322 = vmatprep.mubr.f32.mxu0 0.0
          %323 = vmatmul.mubr.f32.gmra.mrb[0].mxu0 %v256
          %v324 = vpop.f32.mrb[0].mxu0
          %v325 = vadd.f32 %v252, %v324
          %v326 = vpop.f32.mrb[0].mxu0
          %327 = vdwg.mxu0
          %vm328 = vcmask 31744
          %329 = vst.msk [vmem:[#allocation2] sm:$0xff] %vm328, %v325
          %331 = vrot.lane.b32.xlu0 %v325, 96
          %v332 = vpop.permute.xlu0 %331
          %334 = vst.msk [vmem:[#allocation3] sm:$0xff] %vm328, %v332
          %335 = vrot.lane.b32.xlu0 %v325, 64
          %v336 = vpop.permute.xlu0 %335
          %338 = vst.msk [vmem:[#allocation4] sm:$0xff] %vm328, %v336
          %339 = vrot.lane.b32.xlu0 %v325, 124
          %v340 = vpop.permute.xlu0 %339
          %s342 = scalar_lea.vmem [#allocation2], 8
          %343 = vst.msk [vmem:[%s342] sm:$0xff] %vm328, %v340
          %344 = vrot.lane.b32.xlu0 %v325, 92
          %v345 = vpop.permute.xlu0 %344
          %s347 = scalar_lea.vmem [#allocation3], 8
          %348 = vst.msk [vmem:[%s347] sm:$0xff] %vm328, %v345
          %349 = vrot.lane.b32.xlu0 %v325, 60
          %v350 = vpop.permute.xlu0 %349
          %s352 = scalar_lea.vmem [#allocation4], 8
          %353 = vst.msk [vmem:[%s352] sm:$0xff] %vm328, %v350
          %354 = vrot.lane.b32.xlu0 %v325, 120
          %v355 = vpop.permute.xlu0 %354
          %s357 = scalar_lea.vmem [#allocation2], 16
          %358 = vst.msk [vmem:[%s357] sm:$0xff] %vm328, %v355
          %359 = vrot.lane.b32.xlu0 %v325, 88
          %v360 = vpop.permute.xlu0 %359
          %s362 = scalar_lea.vmem [#allocation3], 16
          %363 = vst.msk [vmem:[%s362] sm:$0xff] %vm328, %v360
          %364 = vrot.lane.b32.xlu0 %v325, 56
          %v365 = vpop.permute.xlu0 %364
          %s367 = scalar_lea.vmem [#allocation4], 16
          %368 = vst.msk [vmem:[%s367] sm:$0xff] %vm328, %v365
          %369 = vrot.lane.b32.xlu0 %v325, 116
          %v370 = vpop.permute.xlu0 %369
          %s372 = scalar_lea.vmem [#allocation2], 24
          %373 = vst.msk [vmem:[%s372] sm:$0xff] %vm328, %v370
          %374 = vrot.lane.b32.xlu0 %v325, 84
          %v375 = vpop.permute.xlu0 %374
          %s377 = scalar_lea.vmem [#allocation3], 24
          %378 = vst.msk [vmem:[%s377] sm:$0xff] %vm328, %v375
          %379 = vrot.lane.b32.xlu0 %v325, 52
          %v380 = vpop.permute.xlu0 %379
          %s382 = scalar_lea.vmem [#allocation4], 24
          %383 = vst.msk [vmem:[%s382] sm:$0xff] %vm328, %v380
          %384 = vrot.lane.b32.xlu0 %v325, 112
          %v385 = vpop.permute.xlu0 %384
          %s387 = scalar_lea.vmem [#allocation2], 32
          %388 = vst.msk [vmem:[%s387] sm:$0xff] %vm328, %v385
          %389 = vrot.lane.b32.xlu0 %v325, 80
          %v390 = vpop.permute.xlu0 %389
          %s392 = scalar_lea.vmem [#allocation3], 32
          %393 = vst.msk [vmem:[%s392] sm:$0xff] %vm328, %v390
          %394 = vrot.lane.b32.xlu0 %v325, 48
          %v395 = vpop.permute.xlu0 %394
          %s397 = scalar_lea.vmem [#allocation4], 32
          %398 = vst.msk [vmem:[%s397] sm:$0xff] %vm328, %v395
          %399 = vrot.lane.b32.xlu0 %v325, 108
          %v400 = vpop.permute.xlu0 %399
          %s402 = scalar_lea.vmem [#allocation2], 40
          %403 = vst.msk [vmem:[%s402] sm:$0xff] %vm328, %v400
          %404 = vrot.lane.b32.xlu0 %v325, 76
          %v405 = vpop.permute.xlu0 %404
          %s407 = scalar_lea.vmem [#allocation3], 40
          %408 = vst.msk [vmem:[%s407] sm:$0xff] %vm328, %v405
          %409 = vrot.lane.b32.xlu0 %v325, 44
          %v410 = vpop.permute.xlu0 %409
          %s412 = scalar_lea.vmem [#allocation4], 40
          %413 = vst.msk [vmem:[%s412] sm:$0xff] %vm328, %v410
          %414 = vrot.lane.b32.xlu0 %v325, 104
          %v415 = vpop.permute.xlu0 %414
          %s417 = scalar_lea.vmem [#allocation2], 48
          %418 = vst.msk [vmem:[%s417] sm:$0xff] %vm328, %v415
          %419 = vrot.lane.b32.xlu0 %v325, 72
          %v420 = vpop.permute.xlu0 %419
          %s422 = scalar_lea.vmem [#allocation3], 48
          %423 = vst.msk [vmem:[%s422] sm:$0xff] %vm328, %v420
          %424 = vrot.lane.b32.xlu0 %v325, 40
          %v425 = vpop.permute.xlu0 %424
          %s427 = scalar_lea.vmem [#allocation4], 48
          %428 = vst.msk [vmem:[%s427] sm:$0xff] %vm328, %v425
          %429 = vrot.lane.b32.xlu0 %v325, 100
          %v430 = vpop.permute.xlu0 %429
          %s432 = scalar_lea.vmem [#allocation2], 56
          %433 = vst.msk [vmem:[%s432] sm:$0xff] %vm328, %v430
          %434 = vrot.lane.b32.xlu0 %v325, 68
          %v435 = vpop.permute.xlu0 %434
          %s437 = scalar_lea.vmem [#allocation3], 56
          %438 = vst.msk [vmem:[%s437] sm:$0xff] %vm328, %v435
          %439 = vrot.lane.b32.xlu0 %v325, 36
          %v440 = vpop.permute.xlu0 %439
          %s442 = scalar_lea.vmem [#allocation4], 56
          %443 = vst.msk [vmem:[%s442] sm:$0xff] %vm328, %v440
        $region44: #{tpu_custom_call.1} parent=31 // pred_fallthru
          _
        %s444 = smul.u32 %s29, 8
        %s445 = scalar_lea.vmem [#allocation2], %s444
        %v446 = vld [vmem:[%s445] sm:$0xff]
        %v447 = vld [vmem:[%s445 + $0x8] sm:$0xff]
        %v448 = vld [vmem:[%s445 + $0x10] sm:$0xff]
        %v449 = vld [vmem:[%s445 + $0x18] sm:$0xff]
        %v450 = vld [vmem:[%s445 + $0x20] sm:$0xff]
        %v451 = vld [vmem:[%s445 + $0x28] sm:$0xff]
        %v452 = vld [vmem:[%s445 + $0x30] sm:$0xff]
        %v453 = vld [vmem:[%s445 + $0x38] sm:$0xff]
        %v454 = vld [vmem:[#allocation3] sm:$0xff]
        %v455 = vld [vmem:[#allocation3 + $0x8] sm:$0xff]
        %v456 = vld [vmem:[#allocation3 + $0x10] sm:$0xff]
        %v457 = vld [vmem:[#allocation3 + $0x18] sm:$0xff]
        %v458 = vld [vmem:[#allocation3 + $0x20] sm:$0xff]
        %v459 = vld [vmem:[#allocation3 + $0x28] sm:$0xff]
        %v460 = vld [vmem:[#allocation3 + $0x30] sm:$0xff]
        %v461 = vld [vmem:[#allocation3 + $0x38] sm:$0xff]
        %v462 = vld [vmem:[#allocation4] sm:$0xff]
        %v463 = vld [vmem:[#allocation4 + $0x8] sm:$0xff]
        %v464 = vld [vmem:[#allocation4 + $0x10] sm:$0xff]
        %v465 = vld [vmem:[#allocation4 + $0x18] sm:$0xff]
        %v466 = vld [vmem:[#allocation4 + $0x20] sm:$0xff]
        %v467 = vld [vmem:[#allocation4 + $0x28] sm:$0xff]
        %v468 = vld [vmem:[#allocation4 + $0x30] sm:$0xff]
        %v469 = vld [vmem:[#allocation4 + $0x38] sm:$0xff]
        %vm470 = vcmask 31744
        %v472 = vsel %vm470, %v446, 0
        %v475 = vsel %vm470, %v454, 0
        %477 = vmatprep.subr.mxu0 0.0
        %478 = vmatpush1.xpose.msra.mxu0 %v475
        %479 = vmatprep.subr.mxu0 0.0
        %480 = vmatpush1.xpose.msra.mxu0 0.0
        %481 = vmatprep.subr.mxu0 0.0
        %482 = vmatpush1.xpose.msra.mxu0 0.0
        %483 = vmatprep.subr.mxu0 0.0
        %484 = vmatpush1.xpose.msra.mxu0 0.0
        %485 = vmatprep.subr.mxu0 0.0
        %486 = vmatpush1.xpose.msra.mxu0 0.0
        %487 = vmatprep.subr.mxu0 0.0
        %488 = vmatpush1.xpose.msra.mxu0 0.0
        %489 = vmatprep.subr.mxu0 0.0
        %490 = vmatpush1.xpose.msra.mxu0 0.0
        %491 = vmatprep.subr.mxu0 0.0
        %492 = vmatpush1.xpose.msra.mxu0 0.0
        %493 = vmatprep.subr.mxu0 0.0
        %494 = vmatpush1.xpose.msra.mxu0 0.0
        %495 = vmatprep.subr.mxu0 0.0
        %496 = vmatpush1.xpose.msra.mxu0 0.0
        %497 = vmatprep.subr.mxu0 0.0
        %498 = vmatpush1.xpose.msra.mxu0 0.0
        %499 = vmatprep.subr.mxu0 0.0
        %500 = vmatpush1.xpose.msra.mxu0 0.0
        %501 = vmatprep.subr.mxu0 0.0
        %502 = vmatpush1.xpose.msra.mxu0 0.0
        %503 = vmatprep.subr.mxu0 0.0
        %504 = vmatpush1.xpose.msra.mxu0 0.0
        %505 = vmatprep.subr.mxu0 0.0
        %506 = vmatpush1.xpose.msra.mxu0 0.0
        %507 = vmatprep.subr.mxu0 0.0
        %508 = vmatpush1.xpose.msra.mxu0 0.0
        %509 = vmatprep.subr.mxu0 0.0
        %510 = vmatpush1.xpose.msra.mxu0 0.0
        %511 = vmatprep.subr.mxu0 0.0
        %512 = vmatpush1.xpose.msra.mxu0 0.0
        %513 = vmatprep.subr.mxu0 0.0
        %514 = vmatpush1.xpose.msra.mxu0 0.0
        %515 = vmatprep.subr.mxu0 0.0
        %516 = vmatpush1.xpose.msra.mxu0 0.0
        %517 = vmatprep.subr.mxu0 0.0
        %518 = vmatpush1.xpose.msra.mxu0 0.0
        %519 = vmatprep.subr.mxu0 0.0
        %520 = vmatpush1.xpose.msra.mxu0 0.0
        %521 = vmatprep.subr.mxu0 0.0
        %522 = vmatpush1.xpose.msra.mxu0 0.0
        %523 = vmatprep.subr.mxu0 0.0
        %524 = vmatpush1.xpose.msra.mxu0 0.0
        %525 = vmatprep.subr.mxu0 0.0
        %526 = vmatpush1.xpose.msra.mxu0 0.0
        %527 = vmatprep.subr.mxu0 0.0
        %528 = vmatpush1.xpose.msra.mxu0 0.0
        %529 = vmatprep.subr.mxu0 0.0
        %530 = vmatpush1.xpose.msra.mxu0 0.0
        %531 = vmatprep.subr.mxu0 0.0
        %532 = vmatpush1.xpose.msra.mxu0 0.0
        %533 = vmatprep.subr.mxu0 0.0
        %534 = vmatpush1.xpose.msra.mxu0 0.0
        %535 = vmatprep.subr.mxu0 0.0
        %536 = vmatpush1.xpose.msra.mxu0 0.0
        %537 = vmatprep.subr.mxu0 0.0
        %538 = vmatpush1.xpose.msra.mxu0 0.0
        %539 = vmatprep.subr.mxu0 0.0
        %540 = vmatpush1.xpose.msra.mxu0 0.0
        %541 = vmatprep.mubr.f32.mxu0 0.0
        %542 = vmatmul.mubr.f32.gmra.mrb[0].mxu0 %v472
        %v543 = vpop.f32.mrb[0].mxu0
        %v544 = vadd.f32 0.0, %v543
        %v545 = vpop.f32.mrb[0].mxu0
        %546 = vdwg.mxu0
        %v548 = vsel %vm470, %v447, 0
        %v551 = vsel %vm470, %v455, 0
        %553 = vmatprep.subr.mxu0 0.0
        %554 = vmatpush1.xpose.msra.mxu0 %v551
        %555 = vmatprep.subr.mxu0 0.0
        %556 = vmatpush1.xpose.msra.mxu0 0.0
        %557 = vmatprep.subr.mxu0 0.0
        %558 = vmatpush1.xpose.msra.mxu0 0.0
        %559 = vmatprep.subr.mxu0 0.0
        %560 = vmatpush1.xpose.msra.mxu0 0.0
        %561 = vmatprep.subr.mxu0 0.0
        %562 = vmatpush1.xpose.msra.mxu0 0.0
        %563 = vmatprep.subr.mxu0 0.0
        %564 = vmatpush1.xpose.msra.mxu0 0.0
        %565 = vmatprep.subr.mxu0 0.0
        %566 = vmatpush1.xpose.msra.mxu0 0.0
        %567 = vmatprep.subr.mxu0 0.0
        %568 = vmatpush1.xpose.msra.mxu0 0.0
        %569 = vmatprep.subr.mxu0 0.0
        %570 = vmatpush1.xpose.msra.mxu0 0.0
        %571 = vmatprep.subr.mxu0 0.0
        %572 = vmatpush1.xpose.msra.mxu0 0.0
        %573 = vmatprep.subr.mxu0 0.0
        %574 = vmatpush1.xpose.msra.mxu0 0.0
        %575 = vmatprep.subr.mxu0 0.0
        %576 = vmatpush1.xpose.msra.mxu0 0.0
        %577 = vmatprep.subr.mxu0 0.0
        %578 = vmatpush1.xpose.msra.mxu0 0.0
        %579 = vmatprep.subr.mxu0 0.0
        %580 = vmatpush1.xpose.msra.mxu0 0.0
        %581 = vmatprep.subr.mxu0 0.0
        %582 = vmatpush1.xpose.msra.mxu0 0.0
        %583 = vmatprep.subr.mxu0 0.0
        %584 = vmatpush1.xpose.msra.mxu0 0.0
        %585 = vmatprep.subr.mxu0 0.0
        %586 = vmatpush1.xpose.msra.mxu0 0.0
        %587 = vmatprep.subr.mxu0 0.0
        %588 = vmatpush1.xpose.msra.mxu0 0.0
        %589 = vmatprep.subr.mxu0 0.0
        %590 = vmatpush1.xpose.msra.mxu0 0.0
        %591 = vmatprep.subr.mxu0 0.0
        %592 = vmatpush1.xpose.msra.mxu0 0.0
        %593 = vmatprep.subr.mxu0 0.0
        %594 = vmatpush1.xpose.msra.mxu0 0.0
        %595 = vmatprep.subr.mxu0 0.0
        %596 = vmatpush1.xpose.msra.mxu0 0.0
        %597 = vmatprep.subr.mxu0 0.0
        %598 = vmatpush1.xpose.msra.mxu0 0.0
        %599 = vmatprep.subr.mxu0 0.0
        %600 = vmatpush1.xpose.msra.mxu0 0.0
        %601 = vmatprep.subr.mxu0 0.0
        %602 = vmatpush1.xpose.msra.mxu0 0.0
        %603 = vmatprep.subr.mxu0 0.0
        %604 = vmatpush1.xpose.msra.mxu0 0.0
        %605 = vmatprep.subr.mxu0 0.0
        %606 = vmatpush1.xpose.msra.mxu0 0.0
        %607 = vmatprep.subr.mxu0 0.0
        %608 = vmatpush1.xpose.msra.mxu0 0.0
        %609 = vmatprep.subr.mxu0 0.0
        %610 = vmatpush1.xpose.msra.mxu0 0.0
        %611 = vmatprep.subr.mxu0 0.0
        %612 = vmatpush1.xpose.msra.mxu0 0.0
        %613 = vmatprep.subr.mxu0 0.0
        %614 = vmatpush1.xpose.msra.mxu0 0.0
        %615 = vmatprep.subr.mxu0 0.0
        %616 = vmatpush1.xpose.msra.mxu0 0.0
        %617 = vmatprep.mubr.f32.mxu0 0.0
        %618 = vmatmul.mubr.f32.gmra.mrb[0].mxu0 %v548
        %v619 = vpop.f32.mrb[0].mxu0
        %v620 = vadd.f32 0.0, %v619
        %v621 = vpop.f32.mrb[0].mxu0
        %622 = vdwg.mxu0
        %v624 = vsel %vm470, %v448, 0
        %v627 = vsel %vm470, %v456, 0
        %629 = vmatprep.subr.mxu0 0.0
        %630 = vmatpush1.xpose.msra.mxu0 %v627
        %631 = vmatprep.subr.mxu0 0.0
        %632 = vmatpush1.xpose.msra.mxu0 0.0
        %633 = vmatprep.subr.mxu0 0.0
        %634 = vmatpush1.xpose.msra.mxu0 0.0
        %635 = vmatprep.subr.mxu0 0.0
        %636 = vmatpush1.xpose.msra.mxu0 0.0
        %637 = vmatprep.subr.mxu0 0.0
        %638 = vmatpush1.xpose.msra.mxu0 0.0
        %639 = vmatprep.subr.mxu0 0.0
        %640 = vmatpush1.xpose.msra.mxu0 0.0
        %641 = vmatprep.subr.mxu0 0.0
        %642 = vmatpush1.xpose.msra.mxu0 0.0
        %643 = vmatprep.subr.mxu0 0.0
        %644 = vmatpush1.xpose.msra.mxu0 0.0
        %645 = vmatprep.subr.mxu0 0.0
        %646 = vmatpush1.xpose.msra.mxu0 0.0
        %647 = vmatprep.subr.mxu0 0.0
        %648 = vmatpush1.xpose.msra.mxu0 0.0
        %649 = vmatprep.subr.mxu0 0.0
        %650 = vmatpush1.xpose.msra.mxu0 0.0
        %651 = vmatprep.subr.mxu0 0.0
        %652 = vmatpush1.xpose.msra.mxu0 0.0
        %653 = vmatprep.subr.mxu0 0.0
        %654 = vmatpush1.xpose.msra.mxu0 0.0
        %655 = vmatprep.subr.mxu0 0.0
        %656 = vmatpush1.xpose.msra.mxu0 0.0
        %657 = vmatprep.subr.mxu0 0.0
        %658 = vmatpush1.xpose.msra.mxu0 0.0
        %659 = vmatprep.subr.mxu0 0.0
        %660 = vmatpush1.xpose.msra.mxu0 0.0
        %661 = vmatprep.subr.mxu0 0.0
        %662 = vmatpush1.xpose.msra.mxu0 0.0
        %663 = vmatprep.subr.mxu0 0.0
        %664 = vmatpush1.xpose.msra.mxu0 0.0
        %665 = vmatprep.subr.mxu0 0.0
        %666 = vmatpush1.xpose.msra.mxu0 0.0
        %667 = vmatprep.subr.mxu0 0.0
        %668 = vmatpush1.xpose.msra.mxu0 0.0
        %669 = vmatprep.subr.mxu0 0.0
        %670 = vmatpush1.xpose.msra.mxu0 0.0
        %671 = vmatprep.subr.mxu0 0.0
        %672 = vmatpush1.xpose.msra.mxu0 0.0
        %673 = vmatprep.subr.mxu0 0.0
        %674 = vmatpush1.xpose.msra.mxu0 0.0
        %675 = vmatprep.subr.mxu0 0.0
        %676 = vmatpush1.xpose.msra.mxu0 0.0
        %677 = vmatprep.subr.mxu0 0.0
        %678 = vmatpush1.xpose.msra.mxu0 0.0
        %679 = vmatprep.subr.mxu0 0.0
        %680 = vmatpush1.xpose.msra.mxu0 0.0
        %681 = vmatprep.subr.mxu0 0.0
        %682 = vmatpush1.xpose.msra.mxu0 0.0
        %683 = vmatprep.subr.mxu0 0.0
        %684 = vmatpush1.xpose.msra.mxu0 0.0
        %685 = vmatprep.subr.mxu0 0.0
        %686 = vmatpush1.xpose.msra.mxu0 0.0
        %687 = vmatprep.subr.mxu0 0.0
        %688 = vmatpush1.xpose.msra.mxu0 0.0
        %689 = vmatprep.subr.mxu0 0.0
        %690 = vmatpush1.xpose.msra.mxu0 0.0
        %691 = vmatprep.subr.mxu0 0.0
        %692 = vmatpush1.xpose.msra.mxu0 0.0
        %693 = vmatprep.mubr.f32.mxu0 0.0
        %694 = vmatmul.mubr.f32.gmra.mrb[0].mxu0 %v624
        %v695 = vpop.f32.mrb[0].mxu0
        %v696 = vadd.f32 0.0, %v695
        %v697 = vpop.f32.mrb[0].mxu0
        %698 = vdwg.mxu0
        %v700 = vsel %vm470, %v449, 0
        %v703 = vsel %vm470, %v457, 0
        %705 = vmatprep.subr.mxu0 0.0
        %706 = vmatpush1.xpose.msra.mxu0 %v703
        %707 = vmatprep.subr.mxu0 0.0
        %708 = vmatpush1.xpose.msra.mxu0 0.0
        %709 = vmatprep.subr.mxu0 0.0
        %710 = vmatpush1.xpose.msra.mxu0 0.0
        %711 = vmatprep.subr.mxu0 0.0
        %712 = vmatpush1.xpose.msra.mxu0 0.0
        %713 = vmatprep.subr.mxu0 0.0
        %714 = vmatpush1.xpose.msra.mxu0 0.0
        %715 = vmatprep.subr.mxu0 0.0
        %716 = vmatpush1.xpose.msra.mxu0 0.0
        %717 = vmatprep.subr.mxu0 0.0
        %718 = vmatpush1.xpose.msra.mxu0 0.0
        %719 = vmatprep.subr.mxu0 0.0
        %720 = vmatpush1.xpose.msra.mxu0 0.0
        %721 = vmatprep.subr.mxu0 0.0
        %722 = vmatpush1.xpose.msra.mxu0 0.0
        %723 = vmatprep.subr.mxu0 0.0
        %724 = vmatpush1.xpose.msra.mxu0 0.0
        %725 = vmatprep.subr.mxu0 0.0
        %726 = vmatpush1.xpose.msra.mxu0 0.0
        %727 = vmatprep.subr.mxu0 0.0
        %728 = vmatpush1.xpose.msra.mxu0 0.0
        %729 = vmatprep.subr.mxu0 0.0
        %730 = vmatpush1.xpose.msra.mxu0 0.0
        %731 = vmatprep.subr.mxu0 0.0
        %732 = vmatpush1.xpose.msra.mxu0 0.0
        %733 = vmatprep.subr.mxu0 0.0
        %734 = vmatpush1.xpose.msra.mxu0 0.0
        %735 = vmatprep.subr.mxu0 0.0
        %736 = vmatpush1.xpose.msra.mxu0 0.0
        %737 = vmatprep.subr.mxu0 0.0
        %738 = vmatpush1.xpose.msra.mxu0 0.0
        %739 = vmatprep.subr.mxu0 0.0
        %740 = vmatpush1.xpose.msra.mxu0 0.0
        %741 = vmatprep.subr.mxu0 0.0
        %742 = vmatpush1.xpose.msra.mxu0 0.0
        %743 = vmatprep.subr.mxu0 0.0
        %744 = vmatpush1.xpose.msra.mxu0 0.0
        %745 = vmatprep.subr.mxu0 0.0
        %746 = vmatpush1.xpose.msra.mxu0 0.0
        %747 = vmatprep.subr.mxu0 0.0
        %748 = vmatpush1.xpose.msra.mxu0 0.0
        %749 = vmatprep.subr.mxu0 0.0
        %750 = vmatpush1.xpose.msra.mxu0 0.0
        %751 = vmatprep.subr.mxu0 0.0
        %752 = vmatpush1.xpose.msra.mxu0 0.0
        %753 = vmatprep.subr.mxu0 0.0
        %754 = vmatpush1.xpose.msra.mxu0 0.0
        %755 = vmatprep.subr.mxu0 0.0
        %756 = vmatpush1.xpose.msra.mxu0 0.0
        %757 = vmatprep.subr.mxu0 0.0
        %758 = vmatpush1.xpose.msra.mxu0 0.0
        %759 = vmatprep.subr.mxu0 0.0
        %760 = vmatpush1.xpose.msra.mxu0 0.0
        %761 = vmatprep.subr.mxu0 0.0
        %762 = vmatpush1.xpose.msra.mxu0 0.0
        %763 = vmatprep.subr.mxu0 0.0
        %764 = vmatpush1.xpose.msra.mxu0 0.0
        %765 = vmatprep.subr.mxu0 0.0
        %766 = vmatpush1.xpose.msra.mxu0 0.0
        %767 = vmatprep.subr.mxu0 0.0
        %768 = vmatpush1.xpose.msra.mxu0 0.0
        %769 = vmatprep.mubr.f32.mxu0 0.0
        %770 = vmatmul.mubr.f32.gmra.mrb[0].mxu0 %v700
        %v771 = vpop.f32.mrb[0].mxu0
        %v772 = vadd.f32 0.0, %v771
        %v773 = vpop.f32.mrb[0].mxu0
        %774 = vdwg.mxu0
        %v776 = vsel %vm470, %v450, 0
        %v779 = vsel %vm470, %v458, 0
        %781 = vmatprep.subr.mxu0 0.0
        %782 = vmatpush1.xpose.msra.mxu0 %v779
        %783 = vmatprep.subr.mxu0 0.0
        %784 = vmatpush1.xpose.msra.mxu0 0.0
        %785 = vmatprep.subr.mxu0 0.0
        %786 = vmatpush1.xpose.msra.mxu0 0.0
        %787 = vmatprep.subr.mxu0 0.0
        %788 = vmatpush1.xpose.msra.mxu0 0.0
        %789 = vmatprep.subr.mxu0 0.0
        %790 = vmatpush1.xpose.msra.mxu0 0.0
        %791 = vmatprep.subr.mxu0 0.0
        %792 = vmatpush1.xpose.msra.mxu0 0.0
        %793 = vmatprep.subr.mxu0 0.0
        %794 = vmatpush1.xpose.msra.mxu0 0.0
        %795 = vmatprep.subr.mxu0 0.0
        %796 = vmatpush1.xpose.msra.mxu0 0.0
        %797 = vmatprep.subr.mxu0 0.0
        %798 = vmatpush1.xpose.msra.mxu0 0.0
        %799 = vmatprep.subr.mxu0 0.0
        %800 = vmatpush1.xpose.msra.mxu0 0.0
        %801 = vmatprep.subr.mxu0 0.0
        %802 = vmatpush1.xpose.msra.mxu0 0.0
        %803 = vmatprep.subr.mxu0 0.0
        %804 = vmatpush1.xpose.msra.mxu0 0.0
        %805 = vmatprep.subr.mxu0 0.0
        %806 = vmatpush1.xpose.msra.mxu0 0.0
        %807 = vmatprep.subr.mxu0 0.0
        %808 = vmatpush1.xpose.msra.mxu0 0.0
        %809 = vmatprep.subr.mxu0 0.0
        %810 = vmatpush1.xpose.msra.mxu0 0.0
        %811 = vmatprep.subr.mxu0 0.0
        %812 = vmatpush1.xpose.msra.mxu0 0.0
        %813 = vmatprep.subr.mxu0 0.0
        %814 = vmatpush1.xpose.msra.mxu0 0.0
        %815 = vmatprep.subr.mxu0 0.0
        %816 = vmatpush1.xpose.msra.mxu0 0.0
        %817 = vmatprep.subr.mxu0 0.0
        %818 = vmatpush1.xpose.msra.mxu0 0.0
        %819 = vmatprep.subr.mxu0 0.0
        %820 = vmatpush1.xpose.msra.mxu0 0.0
        %821 = vmatprep.subr.mxu0 0.0
        %822 = vmatpush1.xpose.msra.mxu0 0.0
        %823 = vmatprep.subr.mxu0 0.0
        %824 = vmatpush1.xpose.msra.mxu0 0.0
        %825 = vmatprep.subr.mxu0 0.0
        %826 = vmatpush1.xpose.msra.mxu0 0.0
        %827 = vmatprep.subr.mxu0 0.0
        %828 = vmatpush1.xpose.msra.mxu0 0.0
        %829 = vmatprep.subr.mxu0 0.0
        %830 = vmatpush1.xpose.msra.mxu0 0.0
        %831 = vmatprep.subr.mxu0 0.0
        %832 = vmatpush1.xpose.msra.mxu0 0.0
        %833 = vmatprep.subr.mxu0 0.0
        %834 = vmatpush1.xpose.msra.mxu0 0.0
        %835 = vmatprep.subr.mxu0 0.0
        %836 = vmatpush1.xpose.msra.mxu0 0.0
        %837 = vmatprep.subr.mxu0 0.0
        %838 = vmatpush1.xpose.msra.mxu0 0.0
        %839 = vmatprep.subr.mxu0 0.0
        %840 = vmatpush1.xpose.msra.mxu0 0.0
        %841 = vmatprep.subr.mxu0 0.0
        %842 = vmatpush1.xpose.msra.mxu0 0.0
        %843 = vmatprep.subr.mxu0 0.0
        %844 = vmatpush1.xpose.msra.mxu0 0.0
        %845 = vmatprep.mubr.f32.mxu0 0.0
        %846 = vmatmul.mubr.f32.gmra.mrb[0].mxu0 %v776
        %v847 = vpop.f32.mrb[0].mxu0
        %v848 = vadd.f32 0.0, %v847
        %v849 = vpop.f32.mrb[0].mxu0
        %850 = vdwg.mxu0
        %v852 = vsel %vm470, %v451, 0
        %v855 = vsel %vm470, %v459, 0
        %857 = vmatprep.subr.mxu0 0.0
        %858 = vmatpush1.xpose.msra.mxu0 %v855
        %859 = vmatprep.subr.mxu0 0.0
        %860 = vmatpush1.xpose.msra.mxu0 0.0
        %861 = vmatprep.subr.mxu0 0.0
        %862 = vmatpush1.xpose.msra.mxu0 0.0
        %863 = vmatprep.subr.mxu0 0.0
        %864 = vmatpush1.xpose.msra.mxu0 0.0
        %865 = vmatprep.subr.mxu0 0.0
        %866 = vmatpush1.xpose.msra.mxu0 0.0
        %867 = vmatprep.subr.mxu0 0.0
        %868 = vmatpush1.xpose.msra.mxu0 0.0
        %869 = vmatprep.subr.mxu0 0.0
        %870 = vmatpush1.xpose.msra.mxu0 0.0
        %871 = vmatprep.subr.mxu0 0.0
        %872 = vmatpush1.xpose.msra.mxu0 0.0
        %873 = vmatprep.subr.mxu0 0.0
        %874 = vmatpush1.xpose.msra.mxu0 0.0
        %875 = vmatprep.subr.mxu0 0.0
        %876 = vmatpush1.xpose.msra.mxu0 0.0
        %877 = vmatprep.subr.mxu0 0.0
        %878 = vmatpush1.xpose.msra.mxu0 0.0
        %879 = vmatprep.subr.mxu0 0.0
        %880 = vmatpush1.xpose.msra.mxu0 0.0
        %881 = vmatprep.subr.mxu0 0.0
        %882 = vmatpush1.xpose.msra.mxu0 0.0
        %883 = vmatprep.subr.mxu0 0.0
        %884 = vmatpush1.xpose.msra.mxu0 0.0
        %885 = vmatprep.subr.mxu0 0.0
        %886 = vmatpush1.xpose.msra.mxu0 0.0
        %887 = vmatprep.subr.mxu0 0.0
        %888 = vmatpush1.xpose.msra.mxu0 0.0
        %889 = vmatprep.subr.mxu0 0.0
        %890 = vmatpush1.xpose.msra.mxu0 0.0
        %891 = vmatprep.subr.mxu0 0.0
        %892 = vmatpush1.xpose.msra.mxu0 0.0
        %893 = vmatprep.subr.mxu0 0.0
        %894 = vmatpush1.xpose.msra.mxu0 0.0
        %895 = vmatprep.subr.mxu0 0.0
        %896 = vmatpush1.xpose.msra.mxu0 0.0
        %897 = vmatprep.subr.mxu0 0.0
        %898 = vmatpush1.xpose.msra.mxu0 0.0
        %899 = vmatprep.subr.mxu0 0.0
        %900 = vmatpush1.xpose.msra.mxu0 0.0
        %901 = vmatprep.subr.mxu0 0.0
        %902 = vmatpush1.xpose.msra.mxu0 0.0
        %903 = vmatprep.subr.mxu0 0.0
        %904 = vmatpush1.xpose.msra.mxu0 0.0
        %905 = vmatprep.subr.mxu0 0.0
        %906 = vmatpush1.xpose.msra.mxu0 0.0
        %907 = vmatprep.subr.mxu0 0.0
        %908 = vmatpush1.xpose.msra.mxu0 0.0
        %909 = vmatprep.subr.mxu0 0.0
        %910 = vmatpush1.xpose.msra.mxu0 0.0
        %911 = vmatprep.subr.mxu0 0.0
        %912 = vmatpush1.xpose.msra.mxu0 0.0
        %913 = vmatprep.subr.mxu0 0.0
        %914 = vmatpush1.xpose.msra.mxu0 0.0
        %915 = vmatprep.subr.mxu0 0.0
        %916 = vmatpush1.xpose.msra.mxu0 0.0
        %917 = vmatprep.subr.mxu0 0.0
        %918 = vmatpush1.xpose.msra.mxu0 0.0
        %919 = vmatprep.subr.mxu0 0.0
        %920 = vmatpush1.xpose.msra.mxu0 0.0
        %921 = vmatprep.mubr.f32.mxu0 0.0
        %922 = vmatmul.mubr.f32.gmra.mrb[0].mxu0 %v852
        %v923 = vpop.f32.mrb[0].mxu0
        %v924 = vadd.f32 0.0, %v923
        %v925 = vpop.f32.mrb[0].mxu0
        %926 = vdwg.mxu0
        %v928 = vsel %vm470, %v452, 0
        %v931 = vsel %vm470, %v460, 0
        %933 = vmatprep.subr.mxu0 0.0
        %934 = vmatpush1.xpose.msra.mxu0 %v931
        %935 = vmatprep.subr.mxu0 0.0
        %936 = vmatpush1.xpose.msra.mxu0 0.0
        %937 = vmatprep.subr.mxu0 0.0
        %938 = vmatpush1.xpose.msra.mxu0 0.0
        %939 = vmatprep.subr.mxu0 0.0
        %940 = vmatpush1.xpose.msra.mxu0 0.0
        %941 = vmatprep.subr.mxu0 0.0
        %942 = vmatpush1.xpose.msra.mxu0 0.0
        %943 = vmatprep.subr.mxu0 0.0
        %944 = vmatpush1.xpose.msra.mxu0 0.0
        %945 = vmatprep.subr.mxu0 0.0
        %946 = vmatpush1.xpose.msra.mxu0 0.0
        %947 = vmatprep.subr.mxu0 0.0
        %948 = vmatpush1.xpose.msra.mxu0 0.0
        %949 = vmatprep.subr.mxu0 0.0
        %950 = vmatpush1.xpose.msra.mxu0 0.0
        %951 = vmatprep.subr.mxu0 0.0
        %952 = vmatpush1.xpose.msra.mxu0 0.0
        %953 = vmatprep.subr.mxu0 0.0
        %954 = vmatpush1.xpose.msra.mxu0 0.0
        %955 = vmatprep.subr.mxu0 0.0
        %956 = vmatpush1.xpose.msra.mxu0 0.0
        %957 = vmatprep.subr.mxu0 0.0
        %958 = vmatpush1.xpose.msra.mxu0 0.0
        %959 = vmatprep.subr.mxu0 0.0
        %960 = vmatpush1.xpose.msra.mxu0 0.0
        %961 = vmatprep.subr.mxu0 0.0
        %962 = vmatpush1.xpose.msra.mxu0 0.0
        %963 = vmatprep.subr.mxu0 0.0
        %964 = vmatpush1.xpose.msra.mxu0 0.0
        %965 = vmatprep.subr.mxu0 0.0
        %966 = vmatpush1.xpose.msra.mxu0 0.0
        %967 = vmatprep.subr.mxu0 0.0
        %968 = vmatpush1.xpose.msra.mxu0 0.0
        %969 = vmatprep.subr.mxu0 0.0
        %970 = vmatpush1.xpose.msra.mxu0 0.0
        %971 = vmatprep.subr.mxu0 0.0
        %972 = vmatpush1.xpose.msra.mxu0 0.0
        %973 = vmatprep.subr.mxu0 0.0
        %974 = vmatpush1.xpose.msra.mxu0 0.0
        %975 = vmatprep.subr.mxu0 0.0
        %976 = vmatpush1.xpose.msra.mxu0 0.0
        %977 = vmatprep.subr.mxu0 0.0
        %978 = vmatpush1.xpose.msra.mxu0 0.0
        %979 = vmatprep.subr.mxu0 0.0
        %980 = vmatpush1.xpose.msra.mxu0 0.0
        %981 = vmatprep.subr.mxu0 0.0
        %982 = vmatpush1.xpose.msra.mxu0 0.0
        %983 = vmatprep.subr.mxu0 0.0
        %984 = vmatpush1.xpose.msra.mxu0 0.0
        %985 = vmatprep.subr.mxu0 0.0
        %986 = vmatpush1.xpose.msra.mxu0 0.0
        %987 = vmatprep.subr.mxu0 0.0
        %988 = vmatpush1.xpose.msra.mxu0 0.0
        %989 = vmatprep.subr.mxu0 0.0
        %990 = vmatpush1.xpose.msra.mxu0 0.0
        %991 = vmatprep.subr.mxu0 0.0
        %992 = vmatpush1.xpose.msra.mxu0 0.0
        %993 = vmatprep.subr.mxu0 0.0
        %994 = vmatpush1.xpose.msra.mxu0 0.0
        %995 = vmatprep.subr.mxu0 0.0
        %996 = vmatpush1.xpose.msra.mxu0 0.0
        %997 = vmatprep.mubr.f32.mxu0 0.0
        %998 = vmatmul.mubr.f32.gmra.mrb[0].mxu0 %v928
        %v999 = vpop.f32.mrb[0].mxu0
        %v1000 = vadd.f32 0.0, %v999
        %v1001 = vpop.f32.mrb[0].mxu0
        %1002 = vdwg.mxu0
        %v1004 = vsel %vm470, %v453, 0
        %v1007 = vsel %vm470, %v461, 0
        %1009 = vmatprep.subr.mxu0 0.0
        %1010 = vmatpush1.xpose.msra.mxu0 %v1007
        %1011 = vmatprep.subr.mxu0 0.0
        %1012 = vmatpush1.xpose.msra.mxu0 0.0
        %1013 = vmatprep.subr.mxu0 0.0
        %1014 = vmatpush1.xpose.msra.mxu0 0.0
        %1015 = vmatprep.subr.mxu0 0.0
        %1016 = vmatpush1.xpose.msra.mxu0 0.0
        %1017 = vmatprep.subr.mxu0 0.0
        %1018 = vmatpush1.xpose.msra.mxu0 0.0
        %1019 = vmatprep.subr.mxu0 0.0
        %1020 = vmatpush1.xpose.msra.mxu0 0.0
        %1021 = vmatprep.subr.mxu0 0.0
        %1022 = vmatpush1.xpose.msra.mxu0 0.0
        %1023 = vmatprep.subr.mxu0 0.0
        %1024 = vmatpush1.xpose.msra.mxu0 0.0
        %1025 = vmatprep.subr.mxu0 0.0
        %1026 = vmatpush1.xpose.msra.mxu0 0.0
        %1027 = vmatprep.subr.mxu0 0.0
        %1028 = vmatpush1.xpose.msra.mxu0 0.0
        %1029 = vmatprep.subr.mxu0 0.0
        %1030 = vmatpush1.xpose.msra.mxu0 0.0
        %1031 = vmatprep.subr.mxu0 0.0
        %1032 = vmatpush1.xpose.msra.mxu0 0.0
        %1033 = vmatprep.subr.mxu0 0.0
        %1034 = vmatpush1.xpose.msra.mxu0 0.0
        %1035 = vmatprep.subr.mxu0 0.0
        %1036 = vmatpush1.xpose.msra.mxu0 0.0
        %1037 = vmatprep.subr.mxu0 0.0
        %1038 = vmatpush1.xpose.msra.mxu0 0.0
        %1039 = vmatprep.subr.mxu0 0.0
        %1040 = vmatpush1.xpose.msra.mxu0 0.0
        %1041 = vmatprep.subr.mxu0 0.0
        %1042 = vmatpush1.xpose.msra.mxu0 0.0
        %1043 = vmatprep.subr.mxu0 0.0
        %1044 = vmatpush1.xpose.msra.mxu0 0.0
        %1045 = vmatprep.subr.mxu0 0.0
        %1046 = vmatpush1.xpose.msra.mxu0 0.0
        %1047 = vmatprep.subr.mxu0 0.0
        %1048 = vmatpush1.xpose.msra.mxu0 0.0
        %1049 = vmatprep.subr.mxu0 0.0
        %1050 = vmatpush1.xpose.msra.mxu0 0.0
        %1051 = vmatprep.subr.mxu0 0.0
        %1052 = vmatpush1.xpose.msra.mxu0 0.0
        %1053 = vmatprep.subr.mxu0 0.0
        %1054 = vmatpush1.xpose.msra.mxu0 0.0
        %1055 = vmatprep.subr.mxu0 0.0
        %1056 = vmatpush1.xpose.msra.mxu0 0.0
        %1057 = vmatprep.subr.mxu0 0.0
        %1058 = vmatpush1.xpose.msra.mxu0 0.0
        %1059 = vmatprep.subr.mxu0 0.0
        %1060 = vmatpush1.xpose.msra.mxu0 0.0
        %1061 = vmatprep.subr.mxu0 0.0
        %1062 = vmatpush1.xpose.msra.mxu0 0.0
        %1063 = vmatprep.subr.mxu0 0.0
        %1064 = vmatpush1.xpose.msra.mxu0 0.0
        %1065 = vmatprep.subr.mxu0 0.0
        %1066 = vmatpush1.xpose.msra.mxu0 0.0
        %1067 = vmatprep.subr.mxu0 0.0
        %1068 = vmatpush1.xpose.msra.mxu0 0.0
        %1069 = vmatprep.subr.mxu0 0.0
        %1070 = vmatpush1.xpose.msra.mxu0 0.0
        %1071 = vmatprep.subr.mxu0 0.0
        %1072 = vmatpush1.xpose.msra.mxu0 0.0
        %1073 = vmatprep.mubr.f32.mxu0 0.0
        %1074 = vmatmul.mubr.f32.gmra.mrb[0].mxu0 %v1004
        %v1075 = vpop.f32.mrb[0].mxu0
        %v1076 = vadd.f32 0.0, %v1075
        %v1077 = vpop.f32.mrb[0].mxu0
        %1078 = vdwg.mxu0
        %vm1079 = vcmask 64512
        %v1080 = vsel %vm1079, %v544, -inf
        %1081 = vmax.xlane.f32.xlu0 %v1080
        %v1082 = vpop.xlane.xlu0 %1081
        %v1083 = vsel %vm1079, %v620, -inf
        %1084 = vmax.xlane.f32.xlu0 %v1083
        %v1085 = vpop.xlane.xlu0 %1084
        %v1086 = vsel %vm1079, %v696, -inf
        %1087 = vmax.xlane.f32.xlu0 %v1086
        %v1088 = vpop.xlane.xlu0 %1087
        %v1089 = vsel %vm1079, %v772, -inf
        %1090 = vmax.xlane.f32.xlu0 %v1089
        %v1091 = vpop.xlane.xlu0 %1090
        %v1092 = vsel %vm1079, %v848, -inf
        %1093 = vmax.xlane.f32.xlu0 %v1092
        %v1094 = vpop.xlane.xlu0 %1093
        %v1095 = vsel %vm1079, %v924, -inf
        %1096 = vmax.xlane.f32.xlu0 %v1095
        %v1097 = vpop.xlane.xlu0 %1096
        %v1098 = vsel %vm1079, %v1000, -inf
        %1099 = vmax.xlane.f32.xlu0 %v1098
        %v1100 = vpop.xlane.xlu0 %1099
        %v1101 = vsel %vm1079, %v1076, -inf
        %1102 = vmax.xlane.f32.xlu0 %v1101
        %v1103 = vpop.xlane.xlu0 %1102
        %v1104 = vsub.f32 %v544, %v1082
        %v1105 = vsub.f32 %v620, %v1085
        %v1106 = vsub.f32 %v696, %v1088
        %v1107 = vsub.f32 %v772, %v1091
        %v1108 = vsub.f32 %v848, %v1094
        %v1109 = vsub.f32 %v924, %v1097
        %v1110 = vsub.f32 %v1000, %v1100
        %v1111 = vsub.f32 %v1076, %v1103
        %v1112 = vmul.f32 %v1104, 1.442695
        %v1113 = vpow.pop %v1112
        %v1114 = vmul.f32 %v1105, 1.442695
        %v1115 = vpow.pop %v1114
        %v1116 = vmul.f32 %v1106, 1.442695
        %v1117 = vpow.pop %v1116
        %v1118 = vmul.f32 %v1107, 1.442695
        %v1119 = vpow.pop %v1118
        %v1120 = vmul.f32 %v1108, 1.442695
        %v1121 = vpow.pop %v1120
        %v1122 = vmul.f32 %v1109, 1.442695
        %v1123 = vpow.pop %v1122
        %v1124 = vmul.f32 %v1110, 1.442695
        %v1125 = vpow.pop %v1124
        %v1126 = vmul.f32 %v1111, 1.442695
        %v1127 = vpow.pop %v1126
        %v1128 = vsel %vm1079, %v1113, 0.0
        %1129 = vadd.xlane.f32.xlu0 %v1128
        %v1130 = vpop.xlane.xlu0 %1129
        %v1131 = vsel %vm1079, %v1115, 0.0
        %1132 = vadd.xlane.f32.xlu0 %v1131
        %v1133 = vpop.xlane.xlu0 %1132
        %v1134 = vsel %vm1079, %v1117, 0.0
        %1135 = vadd.xlane.f32.xlu0 %v1134
        %v1136 = vpop.xlane.xlu0 %1135
        %v1137 = vsel %vm1079, %v1119, 0.0
        %1138 = vadd.xlane.f32.xlu0 %v1137
        %v1139 = vpop.xlane.xlu0 %1138
        %v1140 = vsel %vm1079, %v1121, 0.0
        %1141 = vadd.xlane.f32.xlu0 %v1140
        %v1142 = vpop.xlane.xlu0 %1141
        %v1143 = vsel %vm1079, %v1123, 0.0
        %1144 = vadd.xlane.f32.xlu0 %v1143
        %v1145 = vpop.xlane.xlu0 %1144
        %v1146 = vsel %vm1079, %v1125, 0.0
        %1147 = vadd.xlane.f32.xlu0 %v1146
        %v1148 = vpop.xlane.xlu0 %1147
        %v1149 = vsel %vm1079, %v1127, 0.0
        %1150 = vadd.xlane.f32.xlu0 %v1149
        %v1151 = vpop.xlane.xlu0 %1150
        %v1152 = vrcp.pop %v1130
        %v1153 = vrcp.pop %v1133
        %v1154 = vrcp.pop %v1136
        %v1155 = vrcp.pop %v1139
        %v1156 = vrcp.pop %v1142
        %v1157 = vrcp.pop %v1145
        %v1158 = vrcp.pop %v1148
        %v1159 = vrcp.pop %v1151
        %v1160 = vmul.f32 %v1130, %v1152
        %v1161 = vmul.f32 %v1133, %v1153
        %v1162 = vmul.f32 %v1136, %v1154
        %v1163 = vmul.f32 %v1139, %v1155
        %v1164 = vmul.f32 %v1142, %v1156
        %v1165 = vmul.f32 %v1145, %v1157
        %v1166 = vmul.f32 %v1148, %v1158
        %v1167 = vmul.f32 %v1151, %v1159
        %v1168 = vsub.f32 2.0, %v1160
        %v1169 = vsub.f32 2.0, %v1161
        %v1170 = vsub.f32 2.0, %v1162
        %v1171 = vsub.f32 2.0, %v1163
        %v1172 = vsub.f32 2.0, %v1164
        %v1173 = vsub.f32 2.0, %v1165
        %v1174 = vsub.f32 2.0, %v1166
        %v1175 = vsub.f32 2.0, %v1167
        %v1176 = vmul.f32 %v1152, %v1168
        %v1177 = vmul.f32 %v1153, %v1169
        %v1178 = vmul.f32 %v1154, %v1170
        %v1179 = vmul.f32 %v1155, %v1171
        %v1180 = vmul.f32 %v1156, %v1172
        %v1181 = vmul.f32 %v1157, %v1173
        %v1182 = vmul.f32 %v1158, %v1174
        %v1183 = vmul.f32 %v1159, %v1175
        %v1184 = vmul.f32 %v1113, %v1176
        %v1185 = vmul.f32 %v1115, %v1177
        %v1186 = vmul.f32 %v1117, %v1178
        %v1187 = vmul.f32 %v1119, %v1179
        %v1188 = vmul.f32 %v1121, %v1180
        %v1189 = vmul.f32 %v1123, %v1181
        %v1190 = vmul.f32 %v1125, %v1182
        %v1191 = vmul.f32 %v1127, %v1183
        %1192 = vst.msk [vmem:[%s237] sm:$0xff] %vm1079, %v1184
        %1193 = vst.msk [vmem:[%s237 + $0x8] sm:$0xff] %vm1079, %v1185
        %1194 = vst.msk [vmem:[%s237 + $0x10] sm:$0xff] %vm1079, %v1186
        %1195 = vst.msk [vmem:[%s237 + $0x18] sm:$0xff] %vm1079, %v1187
        %1196 = vst.msk [vmem:[%s237 + $0x20] sm:$0xff] %vm1079, %v1188
        %1197 = vst.msk [vmem:[%s237 + $0x28] sm:$0xff] %vm1079, %v1189
        %1198 = vst.msk [vmem:[%s237 + $0x30] sm:$0xff] %vm1079, %v1190
        %1199 = vst.msk [vmem:[%s237 + $0x38] sm:$0xff] %vm1079, %v1191
        %v1201 = vsel %vm1079, %v1184, 0
        %1203 = vmatprep.subr.mxu0 0.0
        %1204 = vmatpush1.msra.mxu0 %v462
        %1205 = vmatprep.subr.mxu0 0.0
        %1206 = vmatpush1.msra.mxu0 0.0
        %1207 = vmatprep.subr.mxu0 0.0
        %1208 = vmatpush1.msra.mxu0 0.0
        %1209 = vmatprep.subr.mxu0 0.0
        %1210 = vmatpush1.msra.mxu0 0.0
        %1211 = vmatprep.subr.mxu0 0.0
        %1212 = vmatpush1.msra.mxu0 0.0
        %1213 = vmatprep.subr.mxu0 0.0
        %1214 = vmatpush1.msra.mxu0 0.0
        %1215 = vmatprep.subr.mxu0 0.0
        %1216 = vmatpush1.msra.mxu0 0.0
        %1217 = vmatprep.subr.mxu0 0.0
        %1218 = vmatpush1.msra.mxu0 0.0
        %1219 = vmatprep.subr.mxu0 0.0
        %1220 = vmatpush1.msra.mxu0 0.0
        %1221 = vmatprep.subr.mxu0 0.0
        %1222 = vmatpush1.msra.mxu0 0.0
        %1223 = vmatprep.subr.mxu0 0.0
        %1224 = vmatpush1.msra.mxu0 0.0
        %1225 = vmatprep.subr.mxu0 0.0
        %1226 = vmatpush1.msra.mxu0 0.0
        %1227 = vmatprep.subr.mxu0 0.0
        %1228 = vmatpush1.msra.mxu0 0.0
        %1229 = vmatprep.subr.mxu0 0.0
        %1230 = vmatpush1.msra.mxu0 0.0
        %1231 = vmatprep.subr.mxu0 0.0
        %1232 = vmatpush1.msra.mxu0 0.0
        %1233 = vmatprep.subr.mxu0 0.0
        %1234 = vmatpush1.msra.mxu0 0.0
        %1235 = vmatprep.subr.mxu0 0.0
        %1236 = vmatpush1.msra.mxu0 0.0
        %1237 = vmatprep.subr.mxu0 0.0
        %1238 = vmatpush1.msra.mxu0 0.0
        %1239 = vmatprep.subr.mxu0 0.0
        %1240 = vmatpush1.msra.mxu0 0.0
        %1241 = vmatprep.subr.mxu0 0.0
        %1242 = vmatpush1.msra.mxu0 0.0
        %1243 = vmatprep.subr.mxu0 0.0
        %1244 = vmatpush1.msra.mxu0 0.0
        %1245 = vmatprep.subr.mxu0 0.0
        %1246 = vmatpush1.msra.mxu0 0.0
        %1247 = vmatprep.subr.mxu0 0.0
        %1248 = vmatpush1.msra.mxu0 0.0
        %1249 = vmatprep.subr.mxu0 0.0
        %1250 = vmatpush1.msra.mxu0 0.0
        %1251 = vmatprep.subr.mxu0 0.0
        %1252 = vmatpush1.msra.mxu0 0.0
        %1253 = vmatprep.subr.mxu0 0.0
        %1254 = vmatpush1.msra.mxu0 0.0
        %1255 = vmatprep.subr.mxu0 0.0
        %1256 = vmatpush1.msra.mxu0 0.0
        %1257 = vmatprep.subr.mxu0 0.0
        %1258 = vmatpush1.msra.mxu0 0.0
        %1259 = vmatprep.subr.mxu0 0.0
        %1260 = vmatpush1.msra.mxu0 0.0
        %1261 = vmatprep.subr.mxu0 0.0
        %1262 = vmatpush1.msra.mxu0 0.0
        %1263 = vmatprep.subr.mxu0 0.0
        %1264 = vmatpush1.msra.mxu0 0.0
        %1265 = vmatprep.subr.mxu0 0.0
        %1266 = vmatpush1.msra.mxu0 0.0
        %1267 = vmatprep.mubr.f32.mxu0 0.0
        %1268 = vmatmul.mubr.f32.gmra.mrb[0].mxu0 %v1201
        %v1269 = vpop.f32.mrb[0].mxu0
        %v1270 = vadd.f32 0.0, %v1269
        %v1271 = vpop.f32.mrb[0].mxu0
        %1272 = vdwg.mxu0
        %v1274 = vsel %vm1079, %v1185, 0
        %1276 = vmatprep.subr.mxu0 0.0
        %1277 = vmatpush1.msra.mxu0 %v463
        %1278 = vmatprep.subr.mxu0 0.0
        %1279 = vmatpush1.msra.mxu0 0.0
        %1280 = vmatprep.subr.mxu0 0.0
        %1281 = vmatpush1.msra.mxu0 0.0
        %1282 = vmatprep.subr.mxu0 0.0
        %1283 = vmatpush1.msra.mxu0 0.0
        %1284 = vmatprep.subr.mxu0 0.0
        %1285 = vmatpush1.msra.mxu0 0.0
        %1286 = vmatprep.subr.mxu0 0.0
        %1287 = vmatpush1.msra.mxu0 0.0
        %1288 = vmatprep.subr.mxu0 0.0
        %1289 = vmatpush1.msra.mxu0 0.0
        %1290 = vmatprep.subr.mxu0 0.0
        %1291 = vmatpush1.msra.mxu0 0.0
        %1292 = vmatprep.subr.mxu0 0.0
        %1293 = vmatpush1.msra.mxu0 0.0
        %1294 = vmatprep.subr.mxu0 0.0
        %1295 = vmatpush1.msra.mxu0 0.0
        %1296 = vmatprep.subr.mxu0 0.0
        %1297 = vmatpush1.msra.mxu0 0.0
        %1298 = vmatprep.subr.mxu0 0.0
        %1299 = vmatpush1.msra.mxu0 0.0
        %1300 = vmatprep.subr.mxu0 0.0
        %1301 = vmatpush1.msra.mxu0 0.0
        %1302 = vmatprep.subr.mxu0 0.0
        %1303 = vmatpush1.msra.mxu0 0.0
        %1304 = vmatprep.subr.mxu0 0.0
        %1305 = vmatpush1.msra.mxu0 0.0
        %1306 = vmatprep.subr.mxu0 0.0
        %1307 = vmatpush1.msra.mxu0 0.0
        %1308 = vmatprep.subr.mxu0 0.0
        %1309 = vmatpush1.msra.mxu0 0.0
        %1310 = vmatprep.subr.mxu0 0.0
        %1311 = vmatpush1.msra.mxu0 0.0
        %1312 = vmatprep.subr.mxu0 0.0
        %1313 = vmatpush1.msra.mxu0 0.0
        %1314 = vmatprep.subr.mxu0 0.0
        %1315 = vmatpush1.msra.mxu0 0.0
        %1316 = vmatprep.subr.mxu0 0.0
        %1317 = vmatpush1.msra.mxu0 0.0
        %1318 = vmatprep.subr.mxu0 0.0
        %1319 = vmatpush1.msra.mxu0 0.0
        %1320 = vmatprep.subr.mxu0 0.0
        %1321 = vmatpush1.msra.mxu0 0.0
        %1322 = vmatprep.subr.mxu0 0.0
        %1323 = vmatpush1.msra.mxu0 0.0
        %1324 = vmatprep.subr.mxu0 0.0
        %1325 = vmatpush1.msra.mxu0 0.0
        %1326 = vmatprep.subr.mxu0 0.0
        %1327 = vmatpush1.msra.mxu0 0.0
        %1328 = vmatprep.subr.mxu0 0.0
        %1329 = vmatpush1.msra.mxu0 0.0
        %1330 = vmatprep.subr.mxu0 0.0
        %1331 = vmatpush1.msra.mxu0 0.0
        %1332 = vmatprep.subr.mxu0 0.0
        %1333 = vmatpush1.msra.mxu0 0.0
        %1334 = vmatprep.subr.mxu0 0.0
        %1335 = vmatpush1.msra.mxu0 0.0
        %1336 = vmatprep.subr.mxu0 0.0
        %1337 = vmatpush1.msra.mxu0 0.0
        %1338 = vmatprep.subr.mxu0 0.0
        %1339 = vmatpush1.msra.mxu0 0.0
        %1340 = vmatprep.mubr.f32.mxu0 0.0
        %1341 = vmatmul.mubr.f32.gmra.mrb[0].mxu0 %v1274
        %v1342 = vpop.f32.mrb[0].mxu0
        %v1343 = vadd.f32 0.0, %v1342
        %v1344 = vpop.f32.mrb[0].mxu0
        %1345 = vdwg.mxu0
        %v1347 = vsel %vm1079, %v1186, 0
        %1349 = vmatprep.subr.mxu0 0.0
        %1350 = vmatpush1.msra.mxu0 %v464
        %1351 = vmatprep.subr.mxu0 0.0
        %1352 = vmatpush1.msra.mxu0 0.0
        %1353 = vmatprep.subr.mxu0 0.0
        %1354 = vmatpush1.msra.mxu0 0.0
        %1355 = vmatprep.subr.mxu0 0.0
        %1356 = vmatpush1.msra.mxu0 0.0
        %1357 = vmatprep.subr.mxu0 0.0
        %1358 = vmatpush1.msra.mxu0 0.0
        %1359 = vmatprep.subr.mxu0 0.0
        %1360 = vmatpush1.msra.mxu0 0.0
        %1361 = vmatprep.subr.mxu0 0.0
        %1362 = vmatpush1.msra.mxu0 0.0
        %1363 = vmatprep.subr.mxu0 0.0
        %1364 = vmatpush1.msra.mxu0 0.0
        %1365 = vmatprep.subr.mxu0 0.0
        %1366 = vmatpush1.msra.mxu0 0.0
        %1367 = vmatprep.subr.mxu0 0.0
        %1368 = vmatpush1.msra.mxu0 0.0
        %1369 = vmatprep.subr.mxu0 0.0
        %1370 = vmatpush1.msra.mxu0 0.0
        %1371 = vmatprep.subr.mxu0 0.0
        %1372 = vmatpush1.msra.mxu0 0.0
        %1373 = vmatprep.subr.mxu0 0.0
        %1374 = vmatpush1.msra.mxu0 0.0
        %1375 = vmatprep.subr.mxu0 0.0
        %1376 = vmatpush1.msra.mxu0 0.0
        %1377 = vmatprep.subr.mxu0 0.0
        %1378 = vmatpush1.msra.mxu0 0.0
        %1379 = vmatprep.subr.mxu0 0.0
        %1380 = vmatpush1.msra.mxu0 0.0
        %1381 = vmatprep.subr.mxu0 0.0
        %1382 = vmatpush1.msra.mxu0 0.0
        %1383 = vmatprep.subr.mxu0 0.0
        %1384 = vmatpush1.msra.mxu0 0.0
        %1385 = vmatprep.subr.mxu0 0.0
        %1386 = vmatpush1.msra.mxu0 0.0
        %1387 = vmatprep.subr.mxu0 0.0
        %1388 = vmatpush1.msra.mxu0 0.0
        %1389 = vmatprep.subr.mxu0 0.0
        %1390 = vmatpush1.msra.mxu0 0.0
        %1391 = vmatprep.subr.mxu0 0.0
        %1392 = vmatpush1.msra.mxu0 0.0
        %1393 = vmatprep.subr.mxu0 0.0
        %1394 = vmatpush1.msra.mxu0 0.0
        %1395 = vmatprep.subr.mxu0 0.0
        %1396 = vmatpush1.msra.mxu0 0.0
        %1397 = vmatprep.subr.mxu0 0.0
        %1398 = vmatpush1.msra.mxu0 0.0
        %1399 = vmatprep.subr.mxu0 0.0
        %1400 = vmatpush1.msra.mxu0 0.0
        %1401 = vmatprep.subr.mxu0 0.0
        %1402 = vmatpush1.msra.mxu0 0.0
        %1403 = vmatprep.subr.mxu0 0.0
        %1404 = vmatpush1.msra.mxu0 0.0
        %1405 = vmatprep.subr.mxu0 0.0
        %1406 = vmatpush1.msra.mxu0 0.0
        %1407 = vmatprep.subr.mxu0 0.0
        %1408 = vmatpush1.msra.mxu0 0.0
        %1409 = vmatprep.subr.mxu0 0.0
        %1410 = vmatpush1.msra.mxu0 0.0
        %1411 = vmatprep.subr.mxu0 0.0
        %1412 = vmatpush1.msra.mxu0 0.0
        %1413 = vmatprep.mubr.f32.mxu0 0.0
        %1414 = vmatmul.mubr.f32.gmra.mrb[0].mxu0 %v1347
        %v1415 = vpop.f32.mrb[0].mxu0
        %v1416 = vadd.f32 0.0, %v1415
        %v1417 = vpop.f32.mrb[0].mxu0
        %1418 = vdwg.mxu0
        %v1420 = vsel %vm1079, %v1187, 0
        %1422 = vmatprep.subr.mxu0 0.0
        %1423 = vmatpush1.msra.mxu0 %v465
        %1424 = vmatprep.subr.mxu0 0.0
        %1425 = vmatpush1.msra.mxu0 0.0
        %1426 = vmatprep.subr.mxu0 0.0
        %1427 = vmatpush1.msra.mxu0 0.0
        %1428 = vmatprep.subr.mxu0 0.0
        %1429 = vmatpush1.msra.mxu0 0.0
        %1430 = vmatprep.subr.mxu0 0.0
        %1431 = vmatpush1.msra.mxu0 0.0
        %1432 = vmatprep.subr.mxu0 0.0
        %1433 = vmatpush1.msra.mxu0 0.0
        %1434 = vmatprep.subr.mxu0 0.0
        %1435 = vmatpush1.msra.mxu0 0.0
        %1436 = vmatprep.subr.mxu0 0.0
        %1437 = vmatpush1.msra.mxu0 0.0
        %1438 = vmatprep.subr.mxu0 0.0
        %1439 = vmatpush1.msra.mxu0 0.0
        %1440 = vmatprep.subr.mxu0 0.0
        %1441 = vmatpush1.msra.mxu0 0.0
        %1442 = vmatprep.subr.mxu0 0.0
        %1443 = vmatpush1.msra.mxu0 0.0
        %1444 = vmatprep.subr.mxu0 0.0
        %1445 = vmatpush1.msra.mxu0 0.0
        %1446 = vmatprep.subr.mxu0 0.0
        %1447 = vmatpush1.msra.mxu0 0.0
        %1448 = vmatprep.subr.mxu0 0.0
        %1449 = vmatpush1.msra.mxu0 0.0
        %1450 = vmatprep.subr.mxu0 0.0
        %1451 = vmatpush1.msra.mxu0 0.0
        %1452 = vmatprep.subr.mxu0 0.0
        %1453 = vmatpush1.msra.mxu0 0.0
        %1454 = vmatprep.subr.mxu0 0.0
        %1455 = vmatpush1.msra.mxu0 0.0
        %1456 = vmatprep.subr.mxu0 0.0
        %1457 = vmatpush1.msra.mxu0 0.0
        %1458 = vmatprep.subr.mxu0 0.0
        %1459 = vmatpush1.msra.mxu0 0.0
        %1460 = vmatprep.subr.mxu0 0.0
        %1461 = vmatpush1.msra.mxu0 0.0
        %1462 = vmatprep.subr.mxu0 0.0
        %1463 = vmatpush1.msra.mxu0 0.0
        %1464 = vmatprep.subr.mxu0 0.0
        %1465 = vmatpush1.msra.mxu0 0.0
        %1466 = vmatprep.subr.mxu0 0.0
        %1467 = vmatpush1.msra.mxu0 0.0
        %1468 = vmatprep.subr.mxu0 0.0
        %1469 = vmatpush1.msra.mxu0 0.0
        %1470 = vmatprep.subr.mxu0 0.0
        %1471 = vmatpush1.msra.mxu0 0.0
        %1472 = vmatprep.subr.mxu0 0.0
        %1473 = vmatpush1.msra.mxu0 0.0
        %1474 = vmatprep.subr.mxu0 0.0
        %1475 = vmatpush1.msra.mxu0 0.0
        %1476 = vmatprep.subr.mxu0 0.0
        %1477 = vmatpush1.msra.mxu0 0.0
        %1478 = vmatprep.subr.mxu0 0.0
        %1479 = vmatpush1.msra.mxu0 0.0
        %1480 = vmatprep.subr.mxu0 0.0
        %1481 = vmatpush1.msra.mxu0 0.0
        %1482 = vmatprep.subr.mxu0 0.0
        %1483 = vmatpush1.msra.mxu0 0.0
        %1484 = vmatprep.subr.mxu0 0.0
        %1485 = vmatpush1.msra.mxu0 0.0
        %1486 = vmatprep.mubr.f32.mxu0 0.0
        %1487 = vmatmul.mubr.f32.gmra.mrb[0].mxu0 %v1420
        %v1488 = vpop.f32.mrb[0].mxu0
        %v1489 = vadd.f32 0.0, %v1488
        %v1490 = vpop.f32.mrb[0].mxu0
        %1491 = vdwg.mxu0
        %v1493 = vsel %vm1079, %v1188, 0
        %1495 = vmatprep.subr.mxu0 0.0
        %1496 = vmatpush1.msra.mxu0 %v466
        %1497 = vmatprep.subr.mxu0 0.0
        %1498 = vmatpush1.msra.mxu0 0.0
        %1499 = vmatprep.subr.mxu0 0.0
        %1500 = vmatpush1.msra.mxu0 0.0
        %1501 = vmatprep.subr.mxu0 0.0
        %1502 = vmatpush1.msra.mxu0 0.0
        %1503 = vmatprep.subr.mxu0 0.0
        %1504 = vmatpush1.msra.mxu0 0.0
        %1505 = vmatprep.subr.mxu0 0.0
        %1506 = vmatpush1.msra.mxu0 0.0
        %1507 = vmatprep.subr.mxu0 0.0
        %1508 = vmatpush1.msra.mxu0 0.0
        %1509 = vmatprep.subr.mxu0 0.0
        %1510 = vmatpush1.msra.mxu0 0.0
        %1511 = vmatprep.subr.mxu0 0.0
        %1512 = vmatpush1.msra.mxu0 0.0
        %1513 = vmatprep.subr.mxu0 0.0
        %1514 = vmatpush1.msra.mxu0 0.0
        %1515 = vmatprep.subr.mxu0 0.0
        %1516 = vmatpush1.msra.mxu0 0.0
        %1517 = vmatprep.subr.mxu0 0.0
        %1518 = vmatpush1.msra.mxu0 0.0
        %1519 = vmatprep.subr.mxu0 0.0
        %1520 = vmatpush1.msra.mxu0 0.0
        %1521 = vmatprep.subr.mxu0 0.0
        %1522 = vmatpush1.msra.mxu0 0.0
        %1523 = vmatprep.subr.mxu0 0.0
        %1524 = vmatpush1.msra.mxu0 0.0
        %1525 = vmatprep.subr.mxu0 0.0
        %1526 = vmatpush1.msra.mxu0 0.0
        %1527 = vmatprep.subr.mxu0 0.0
        %1528 = vmatpush1.msra.mxu0 0.0
        %1529 = vmatprep.subr.mxu0 0.0
        %1530 = vmatpush1.msra.mxu0 0.0
        %1531 = vmatprep.subr.mxu0 0.0
        %1532 = vmatpush1.msra.mxu0 0.0
        %1533 = vmatprep.subr.mxu0 0.0
        %1534 = vmatpush1.msra.mxu0 0.0
        %1535 = vmatprep.subr.mxu0 0.0
        %1536 = vmatpush1.msra.mxu0 0.0
        %1537 = vmatprep.subr.mxu0 0.0
        %1538 = vmatpush1.msra.mxu0 0.0
        %1539 = vmatprep.subr.mxu0 0.0
        %1540 = vmatpush1.msra.mxu0 0.0
        %1541 = vmatprep.subr.mxu0 0.0
        %1542 = vmatpush1.msra.mxu0 0.0
        %1543 = vmatprep.subr.mxu0 0.0
        %1544 = vmatpush1.msra.mxu0 0.0
        %1545 = vmatprep.subr.mxu0 0.0
        %1546 = vmatpush1.msra.mxu0 0.0
        %1547 = vmatprep.subr.mxu0 0.0
        %1548 = vmatpush1.msra.mxu0 0.0
        %1549 = vmatprep.subr.mxu0 0.0
        %1550 = vmatpush1.msra.mxu0 0.0
        %1551 = vmatprep.subr.mxu0 0.0
        %1552 = vmatpush1.msra.mxu0 0.0
        %1553 = vmatprep.subr.mxu0 0.0
        %1554 = vmatpush1.msra.mxu0 0.0
        %1555 = vmatprep.subr.mxu0 0.0
        %1556 = vmatpush1.msra.mxu0 0.0
        %1557 = vmatprep.subr.mxu0 0.0
        %1558 = vmatpush1.msra.mxu0 0.0
        %1559 = vmatprep.mubr.f32.mxu0 0.0
        %1560 = vmatmul.mubr.f32.gmra.mrb[0].mxu0 %v1493
        %v1561 = vpop.f32.mrb[0].mxu0
        %v1562 = vadd.f32 0.0, %v1561
        %v1563 = vpop.f32.mrb[0].mxu0
        %1564 = vdwg.mxu0
        %v1566 = vsel %vm1079, %v1189, 0
        %1568 = vmatprep.subr.mxu0 0.0
        %1569 = vmatpush1.msra.mxu0 %v467
        %1570 = vmatprep.subr.mxu0 0.0
        %1571 = vmatpush1.msra.mxu0 0.0
        %1572 = vmatprep.subr.mxu0 0.0
        %1573 = vmatpush1.msra.mxu0 0.0
        %1574 = vmatprep.subr.mxu0 0.0
        %1575 = vmatpush1.msra.mxu0 0.0
        %1576 = vmatprep.subr.mxu0 0.0
        %1577 = vmatpush1.msra.mxu0 0.0
        %1578 = vmatprep.subr.mxu0 0.0
        %1579 = vmatpush1.msra.mxu0 0.0
        %1580 = vmatprep.subr.mxu0 0.0
        %1581 = vmatpush1.msra.mxu0 0.0
        %1582 = vmatprep.subr.mxu0 0.0
        %1583 = vmatpush1.msra.mxu0 0.0
        %1584 = vmatprep.subr.mxu0 0.0
        %1585 = vmatpush1.msra.mxu0 0.0
        %1586 = vmatprep.subr.mxu0 0.0
        %1587 = vmatpush1.msra.mxu0 0.0
        %1588 = vmatprep.subr.mxu0 0.0
        %1589 = vmatpush1.msra.mxu0 0.0
        %1590 = vmatprep.subr.mxu0 0.0
        %1591 = vmatpush1.msra.mxu0 0.0
        %1592 = vmatprep.subr.mxu0 0.0
        %1593 = vmatpush1.msra.mxu0 0.0
        %1594 = vmatprep.subr.mxu0 0.0
        %1595 = vmatpush1.msra.mxu0 0.0
        %1596 = vmatprep.subr.mxu0 0.0
        %1597 = vmatpush1.msra.mxu0 0.0
        %1598 = vmatprep.subr.mxu0 0.0
        %1599 = vmatpush1.msra.mxu0 0.0
        %1600 = vmatprep.subr.mxu0 0.0
        %1601 = vmatpush1.msra.mxu0 0.0
        %1602 = vmatprep.subr.mxu0 0.0
        %1603 = vmatpush1.msra.mxu0 0.0
        %1604 = vmatprep.subr.mxu0 0.0
        %1605 = vmatpush1.msra.mxu0 0.0
        %1606 = vmatprep.subr.mxu0 0.0
        %1607 = vmatpush1.msra.mxu0 0.0
        %1608 = vmatprep.subr.mxu0 0.0
        %1609 = vmatpush1.msra.mxu0 0.0
        %1610 = vmatprep.subr.mxu0 0.0
        %1611 = vmatpush1.msra.mxu0 0.0
        %1612 = vmatprep.subr.mxu0 0.0
        %1613 = vmatpush1.msra.mxu0 0.0
        %1614 = vmatprep.subr.mxu0 0.0
        %1615 = vmatpush1.msra.mxu0 0.0
        %1616 = vmatprep.subr.mxu0 0.0
        %1617 = vmatpush1.msra.mxu0 0.0
        %1618 = vmatprep.subr.mxu0 0.0
        %1619 = vmatpush1.msra.mxu0 0.0
        %1620 = vmatprep.subr.mxu0 0.0
        %1621 = vmatpush1.msra.mxu0 0.0
        %1622 = vmatprep.subr.mxu0 0.0
        %1623 = vmatpush1.msra.mxu0 0.0
        %1624 = vmatprep.subr.mxu0 0.0
        %1625 = vmatpush1.msra.mxu0 0.0
        %1626 = vmatprep.subr.mxu0 0.0
        %1627 = vmatpush1.msra.mxu0 0.0
        %1628 = vmatprep.subr.mxu0 0.0
        %1629 = vmatpush1.msra.mxu0 0.0
        %1630 = vmatprep.subr.mxu0 0.0
        %1631 = vmatpush1.msra.mxu0 0.0
        %1632 = vmatprep.mubr.f32.mxu0 0.0
        %1633 = vmatmul.mubr.f32.gmra.mrb[0].mxu0 %v1566
        %v1634 = vpop.f32.mrb[0].mxu0
        %v1635 = vadd.f32 0.0, %v1634
        %v1636 = vpop.f32.mrb[0].mxu0
        %1637 = vdwg.mxu0
        %v1639 = vsel %vm1079, %v1190, 0
        %1641 = vmatprep.subr.mxu0 0.0
        %1642 = vmatpush1.msra.mxu0 %v468
        %1643 = vmatprep.subr.mxu0 0.0
        %1644 = vmatpush1.msra.mxu0 0.0
        %1645 = vmatprep.subr.mxu0 0.0
        %1646 = vmatpush1.msra.mxu0 0.0
        %1647 = vmatprep.subr.mxu0 0.0
        %1648 = vmatpush1.msra.mxu0 0.0
        %1649 = vmatprep.subr.mxu0 0.0
        %1650 = vmatpush1.msra.mxu0 0.0
        %1651 = vmatprep.subr.mxu0 0.0
        %1652 = vmatpush1.msra.mxu0 0.0
        %1653 = vmatprep.subr.mxu0 0.0
        %1654 = vmatpush1.msra.mxu0 0.0
        %1655 = vmatprep.subr.mxu0 0.0
        %1656 = vmatpush1.msra.mxu0 0.0
        %1657 = vmatprep.subr.mxu0 0.0
        %1658 = vmatpush1.msra.mxu0 0.0
        %1659 = vmatprep.subr.mxu0 0.0
        %1660 = vmatpush1.msra.mxu0 0.0
        %1661 = vmatprep.subr.mxu0 0.0
        %1662 = vmatpush1.msra.mxu0 0.0
        %1663 = vmatprep.subr.mxu0 0.0
        %1664 = vmatpush1.msra.mxu0 0.0
        %1665 = vmatprep.subr.mxu0 0.0
        %1666 = vmatpush1.msra.mxu0 0.0
        %1667 = vmatprep.subr.mxu0 0.0
        %1668 = vmatpush1.msra.mxu0 0.0
        %1669 = vmatprep.subr.mxu0 0.0
        %1670 = vmatpush1.msra.mxu0 0.0
        %1671 = vmatprep.subr.mxu0 0.0
        %1672 = vmatpush1.msra.mxu0 0.0
        %1673 = vmatprep.subr.mxu0 0.0
        %1674 = vmatpush1.msra.mxu0 0.0
        %1675 = vmatprep.subr.mxu0 0.0
        %1676 = vmatpush1.msra.mxu0 0.0
        %1677 = vmatprep.subr.mxu0 0.0
        %1678 = vmatpush1.msra.mxu0 0.0
        %1679 = vmatprep.subr.mxu0 0.0
        %1680 = vmatpush1.msra.mxu0 0.0
        %1681 = vmatprep.subr.mxu0 0.0
        %1682 = vmatpush1.msra.mxu0 0.0
        %1683 = vmatprep.subr.mxu0 0.0
        %1684 = vmatpush1.msra.mxu0 0.0
        %1685 = vmatprep.subr.mxu0 0.0
        %1686 = vmatpush1.msra.mxu0 0.0
        %1687 = vmatprep.subr.mxu0 0.0
        %1688 = vmatpush1.msra.mxu0 0.0
        %1689 = vmatprep.subr.mxu0 0.0
        %1690 = vmatpush1.msra.mxu0 0.0
        %1691 = vmatprep.subr.mxu0 0.0
        %1692 = vmatpush1.msra.mxu0 0.0
        %1693 = vmatprep.subr.mxu0 0.0
        %1694 = vmatpush1.msra.mxu0 0.0
        %1695 = vmatprep.subr.mxu0 0.0
        %1696 = vmatpush1.msra.mxu0 0.0
        %1697 = vmatprep.subr.mxu0 0.0
        %1698 = vmatpush1.msra.mxu0 0.0
        %1699 = vmatprep.subr.mxu0 0.0
        %1700 = vmatpush1.msra.mxu0 0.0
        %1701 = vmatprep.subr.mxu0 0.0
        %1702 = vmatpush1.msra.mxu0 0.0
        %1703 = vmatprep.subr.mxu0 0.0
        %1704 = vmatpush1.msra.mxu0 0.0
        %1705 = vmatprep.mubr.f32.mxu0 0.0
        %1706 = vmatmul.mubr.f32.gmra.mrb[0].mxu0 %v1639
        %v1707 = vpop.f32.mrb[0].mxu0
        %v1708 = vadd.f32 0.0, %v1707
        %v1709 = vpop.f32.mrb[0].mxu0
        %1710 = vdwg.mxu0
        %v1712 = vsel %vm1079, %v1191, 0
        %1714 = vmatprep.subr.mxu0 0.0
        %1715 = vmatpush1.msra.mxu0 %v469
        %1716 = vmatprep.subr.mxu0 0.0
        %1717 = vmatpush1.msra.mxu0 0.0
        %1718 = vmatprep.subr.mxu0 0.0
        %1719 = vmatpush1.msra.mxu0 0.0
        %1720 = vmatprep.subr.mxu0 0.0
        %1721 = vmatpush1.msra.mxu0 0.0
        %1722 = vmatprep.subr.mxu0 0.0
        %1723 = vmatpush1.msra.mxu0 0.0
        %1724 = vmatprep.subr.mxu0 0.0
        %1725 = vmatpush1.msra.mxu0 0.0
        %1726 = vmatprep.subr.mxu0 0.0
        %1727 = vmatpush1.msra.mxu0 0.0
        %1728 = vmatprep.subr.mxu0 0.0
        %1729 = vmatpush1.msra.mxu0 0.0
        %1730 = vmatprep.subr.mxu0 0.0
        %1731 = vmatpush1.msra.mxu0 0.0
        %1732 = vmatprep.subr.mxu0 0.0
        %1733 = vmatpush1.msra.mxu0 0.0
        %1734 = vmatprep.subr.mxu0 0.0
        %1735 = vmatpush1.msra.mxu0 0.0
        %1736 = vmatprep.subr.mxu0 0.0
        %1737 = vmatpush1.msra.mxu0 0.0
        %1738 = vmatprep.subr.mxu0 0.0
        %1739 = vmatpush1.msra.mxu0 0.0
        %1740 = vmatprep.subr.mxu0 0.0
        %1741 = vmatpush1.msra.mxu0 0.0
        %1742 = vmatprep.subr.mxu0 0.0
        %1743 = vmatpush1.msra.mxu0 0.0
        %1744 = vmatprep.subr.mxu0 0.0
        %1745 = vmatpush1.msra.mxu0 0.0
        %1746 = vmatprep.subr.mxu0 0.0
        %1747 = vmatpush1.msra.mxu0 0.0
        %1748 = vmatprep.subr.mxu0 0.0
        %1749 = vmatpush1.msra.mxu0 0.0
        %1750 = vmatprep.subr.mxu0 0.0
        %1751 = vmatpush1.msra.mxu0 0.0
        %1752 = vmatprep.subr.mxu0 0.0
        %1753 = vmatpush1.msra.mxu0 0.0
        %1754 = vmatprep.subr.mxu0 0.0
        %1755 = vmatpush1.msra.mxu0 0.0
        %1756 = vmatprep.subr.mxu0 0.0
        %1757 = vmatpush1.msra.mxu0 0.0
        %1758 = vmatprep.subr.mxu0 0.0
        %1759 = vmatpush1.msra.mxu0 0.0
        %1760 = vmatprep.subr.mxu0 0.0
        %1761 = vmatpush1.msra.mxu0 0.0
        %1762 = vmatprep.subr.mxu0 0.0
        %1763 = vmatpush1.msra.mxu0 0.0
        %1764 = vmatprep.subr.mxu0 0.0
        %1765 = vmatpush1.msra.mxu0 0.0
        %1766 = vmatprep.subr.mxu0 0.0
        %1767 = vmatpush1.msra.mxu0 0.0
        %1768 = vmatprep.subr.mxu0 0.0
        %1769 = vmatpush1.msra.mxu0 0.0
        %1770 = vmatprep.subr.mxu0 0.0
        %1771 = vmatpush1.msra.mxu0 0.0
        %1772 = vmatprep.subr.mxu0 0.0
        %1773 = vmatpush1.msra.mxu0 0.0
        %1774 = vmatprep.subr.mxu0 0.0
        %1775 = vmatpush1.msra.mxu0 0.0
        %1776 = vmatprep.subr.mxu0 0.0
        %1777 = vmatpush1.msra.mxu0 0.0
        %1778 = vmatprep.mubr.f32.mxu0 0.0
        %1779 = vmatmul.mubr.f32.gmra.mrb[0].mxu0 %v1712
        %v1780 = vpop.f32.mrb[0].mxu0
        %v1781 = vadd.f32 0.0, %v1780
        %v1782 = vpop.f32.mrb[0].mxu0
        %1783 = vdwg.mxu0
        %1785 = vrot.lane.b32.xlu0 %v1343, 4
        %v1786 = vpop.permute.xlu0 %1785
        %1789 = vrot.lane.b32.xlu0 %v1416, 8
        %v1790 = vpop.permute.xlu0 %1789
        %1793 = vrot.lane.b32.xlu0 %v1489, 12
        %v1794 = vpop.permute.xlu0 %1793
        %1797 = vrot.lane.b32.xlu0 %v1562, 16
        %v1798 = vpop.permute.xlu0 %1797
        %1801 = vrot.lane.b32.xlu0 %v1635, 20
        %v1802 = vpop.permute.xlu0 %1801
        %1805 = vrot.lane.b32.xlu0 %v1708, 24
        %v1806 = vpop.permute.xlu0 %1805
        %1809 = vrot.lane.b32.xlu0 %v1781, 28
        %v1810 = vpop.permute.xlu0 %1809
        %v1812 = vsel %vm470, %v1270, %v1786
        %v1813 = vsel %vm1079, %v1812, %v1790
        %vm1814 = vcmask 97280
        %v1815 = vsel %vm1814, %v1813, %v1794
        %vm1816 = vcmask 130048
        %v1817 = vsel %vm1816, %v1815, %v1798
        %vm1818 = vcmask 162816
        %v1819 = vsel %vm1818, %v1817, %v1802
        %vm1820 = vcmask 195584
        %v1821 = vsel %vm1820, %v1819, %v1806
        %vm1822 = vcmask 228352
        %v1823 = vsel %vm1822, %v1821, %v1810
        %vm1824 = vcmask 261120
        %1825 = vst.msk [vmem:[%s230] sm:$0xff] %vm1824, %v1823
        %s1826 = sand.u32 %s114, 1
        %s1827 = scalar_lea.sflag [#allocation7], %s1826
        %s1828 = sand.u32 %s114, 1
        %s1829 = smul.addr %s1828, 8
        %s1830 = scalar_lea.vmem [#allocation10], %s1829
        %s1831 = sand.u32 %s142, 1
        %s1832 = scalar_lea.sflag [#allocation12], %s1831
        %s1833 = sand.u32 %s142, 1
        %s1834 = smul.addr %s1833, 64
        %s1835 = scalar_lea.vmem [#allocation11], %s1834
        // Predicated region
        $region45: #{tpu_custom_call.1} parent=31 // pred_check
          %p1836 = pneg %p124
        $region46: #{tpu_custom_call.1} parent=31 // pred_check_branch
          %1838 = sbr.rel (%p1836) target = $region48
        $region47: #{tpu_custom_call.1} parent=31 // pred_region
          %s1840 = ssub.s32 128, 128
          %1841 = vsyncadd %s1827, %s1840
          %s1842 = sadd.s32 %s29, %s28
          %s1843 = smul.addr %s1842, 128
          %s1844 = scalar_lea.hbm %s3, %s1843
          %s1846 = sshll.u32 %s1830, 4
          %s1847 = int_to_ptr.vmem [resolvable:$true] %s1846
          %1849 = dma.vmem_to_hbm [thread:$0]  %s1847, 128, %s1844, %s1827
        $region48: #{tpu_custom_call.1} parent=31 // pred_fallthru
          _
        // Predicated region
        $region49: #{tpu_custom_call.1} parent=31 // pred_check
          %p1850 = pneg %p152
        $region50: #{tpu_custom_call.1} parent=31 // pred_check_branch
          %1852 = sbr.rel (%p1850) target = $region52
        $region51: #{tpu_custom_call.1} parent=31 // pred_region
          %s1854 = ssub.s32 1024, 1024
          %1855 = vsyncadd %s1832, %s1854
          %s1856 = smul.addr %s28, 8
          %s1857 = sadd.s32 %s29, %s1856
          %s1858 = smul.addr %s1857, 128
          %s1859 = scalar_lea.hbm %s4, %s1858
          %s1860 = sshll.u32 %s1835, 4
          %s1861 = int_to_ptr.vmem [resolvable:$true] %s1860
          %1866 = dma.vmem_to_hbm [thread:$0]  %s1861, 1024, %s1859, %s1832, 128, 128, 8
        $region52: #{tpu_custom_call.1} parent=31 // pred_fallthru
          _
      $region32: #{tpu_custom_call.1} parent=5 // pred_fallthru
        _
      %p1867 = scmp.le.s32.totalorder 2, %s19
      // Predicated region
      $region53: #{tpu_custom_call.1} parent=5 // pred_check
        %p1868 = pneg %p1867
      $region54: #{tpu_custom_call.1} parent=5 // pred_check_branch
        %1870 = sbr.rel (%p1868) target = $region56
      $region55: #{tpu_custom_call.1} parent=5 // pred_region
        %s1871 = ssub.s32 %s19, 2
        // Predicated region
        $region57: #{tpu_custom_call.1} parent=55 // pred_check
          %p1872 = pneg %p130
        $region58: #{tpu_custom_call.1} parent=55 // pred_check_branch
          %1874 = sbr.rel (%p1872) target = $region60
        $region59: #{tpu_custom_call.1} parent=55 // pred_region
          %s1875 = sand.u32 %s115, 1
          %s1876 = scalar_lea.sflag [#allocation7], %s1875
          %s1877 = sand.u32 %s115, 1
          %s1878 = smul.addr %s1877, 8
          %s1879 = scalar_lea.vmem [#allocation10], %s1878
          %1880 = dma.done %s1876, 128
        $region60: #{tpu_custom_call.1} parent=55 // pred_fallthru
          _
        // Predicated region
        $region61: #{tpu_custom_call.1} parent=55 // pred_check
          %p1881 = pneg %p158
        $region62: #{tpu_custom_call.1} parent=55 // pred_check_branch
          %1883 = sbr.rel (%p1881) target = $region64
        $region63: #{tpu_custom_call.1} parent=55 // pred_region
          %s1884 = sand.u32 %s143, 1
          %s1885 = scalar_lea.sflag [#allocation12], %s1884
          %s1886 = sand.u32 %s143, 1
          %s1887 = smul.addr %s1886, 64
          %s1888 = scalar_lea.vmem [#allocation11], %s1887
          %1889 = dma.done %s1885, 1024
        $region64: #{tpu_custom_call.1} parent=55 // pred_fallthru
          _
      $region56: #{tpu_custom_call.1} parent=5 // pred_fallthru
        _
    $region6: #{tpu_custom_call.1} parent=1 // loop_footer
      %s23 = sadd.s32 1, %s19
    $region7: #{tpu_custom_call.1} parent=1 // loop_footer_branch
      %18 = sbr.rel target = $region3
    $region8: #{tpu_custom_call.1} parent=1 // loop_exit
      _
    %1890 = vsyncpa [#allocation6], 1
    %s1891 = scalar_lea.sflag [#allocation6], 1
    %1892 = vsyncpa %s1891, 1
    %1893 = vsyncpa [#allocation9], 1
    %1894 = vsyncpa [#allocation7], 1
    %s1895 = scalar_lea.sflag [#allocation7], 1
    %1896 = vsyncpa %s1895, 1
    %1897 = vsyncpa [#allocation12], 1
    %s1898 = scalar_lea.sflag [#allocation12], 1
    %1899 = vsyncpa %s1898, 1

</llo_original>
